<compile_context>
chip_gen: v7x
topology: tpu7x:2x2x1
jax: 0.10.0
libtpu: 0.0.40
codegen_flags: <defaults>
</compile_context>

<pallas_src>
import jax
import jax.numpy as jnp
from jax.experimental import pallas as pl
from jax.experimental.pallas import tpu as pltpu


def _full_spec(shape):
    nd = len(shape)
    return pl.BlockSpec(shape, lambda i, _nd=nd: (0,) * _nd)


def _reorder_gates(w, H):
    """Reorder gate blocks along axis 0 from PyTorch (i, f, g, o) to (i, f, o, g)."""
    return jnp.concatenate([w[:H], w[H:2 * H], w[3 * H:4 * H], w[2 * H:3 * H]],
                           axis=0)


def _make_kernel(num_layers, hidden_dim, B_pad, T, mm_dtype):
    H = hidden_dim
    H3 = 3 * H
    H4 = 4 * H
    L = num_layers

    def kernel(*refs):
        # ref layout:
        #   refs[0]                  x_flat   (T*B_pad, D)   time-major, flat
        #   refs[1]                  w_ih0^T  (D, 4H)         gate order i,f,o,g
        #   refs[2+2l], refs[3+2l]   R_l, b_l   for l = 0..L-1
        #       R_l = [W_hh_l^T | W_ih_{l+1}^T]  (H, 8H)   for l < L-1
        #       R_l =  W_hh_l^T                  (H, 4H)   for l = L-1
        #   refs[2+2L], refs[3+2L]   fc_w^T (H, D_out), fc_b (1, D_out)
        #   refs[4+2L]               out (B_pad, D_out)
        x_ref = refs[0]
        w_ih0_ref = refs[1]
        R = [refs[2 + 2 * l][...] for l in range(L)]   # loop-invariant RHS values
        b = [refs[3 + 2 * l][...] for l in range(L)]   # fused b_ih + b_hh (f32)
        fc_w_ref = refs[2 + 2 * L]
        fc_b_ref = refs[3 + 2 * L]
        out_ref = refs[4 + 2 * L]

        # Hoisted (broadcast is not CSE'd by JAX): full-vreg activation mask —
        # sigmoid on lanes [0, 3H) (i, f, o), tanh on lanes [3H, 4H) (g).
        lane = jax.lax.broadcasted_iota(jnp.int32, (B_pad, H4), 1)
        sig_mask = lane < H3

        # Hoisted layer-0 input projection for all T steps: one big MXU matmul.
        inproj0 = jnp.dot(x_ref[...], w_ih0_ref[...],
                          preferred_element_type=jnp.float32)   # (T*B_pad, 4H) f32

        # Per layer / per step input-projection term (f32, (B_pad, 4H)).
        inproj = [[None] * T for _ in range(L)]
        for t in range(T):
            inproj[0][t] = inproj0[t * B_pad:(t + 1) * B_pad, :]

        h = [None] * L   # f32 hidden state per layer (after last processed step)
        c = [None] * L   # f32 cell state per layer

        def cell_step(l, t):
            gates = inproj[l][t] + b[l]
            if t > 0:
                # Fused recurrent matmul: first 4H columns are layer l's
                # recurrent term; for l < L-1 the last 4H columns are layer
                # l+1's input projection at step t-1 (LHS is h_l[t-1]).
                rec = jnp.dot(h[l].astype(mm_dtype), R[l],
                              preferred_element_type=jnp.float32)
                gates = gates + rec[:, :H4]
                if l + 1 < L:
                    inproj[l + 1][t - 1] = rec[:, H4:]
            # Full (B_pad, 4H) vreg activations + one select; slice gate groups.
            act = jnp.where(sig_mask, jax.nn.sigmoid(gates), jnp.tanh(gates))
            i_g = act[:, 0:H]
            f_g = act[:, H:2 * H]
            o_g = act[:, 2 * H:3 * H]
            g_g = act[:, 3 * H:]
            if t == 0:
                c_new = i_g * g_g                  # h0 = c0 = 0: skip f*c
            else:
                c_new = f_g * c[l] + i_g * g_g
            h_new = o_g * jnp.tanh(c_new)
            h[l], c[l] = h_new, c_new
            if t == T - 1 and l + 1 < L:
                # No layer-l step T to fuse with: standalone input projection
                # for the next layer's final step.
                inproj[l + 1][T - 1] = jnp.dot(
                    h_new.astype(mm_dtype), R[l][:, H4:],
                    preferred_element_type=jnp.float32)

        # Software wavefront: layer l runs two steps behind layer l-1, so the
        # per-stage cell steps of different layers are mutually independent.
        # Fully unrolled (T, L static & small) for LLO scheduler visibility.
        for s in range(T + 2 * (L - 1)):
            for l in range(L):
                t = s - 2 * l
                if 0 <= t < T:
                    cell_step(l, t)

        # fc1 applied to out[:, -1, :] == top-layer hidden at the last step.
        out_ref[...] = (
            jnp.dot(h[L - 1].astype(mm_dtype), fc_w_ref[...],
                    preferred_element_type=jnp.float32) + fc_b_ref[...]
        )

    return kernel


def lstm_model_forward(x, layer_params, fc_w, fc_b, hidden_dim, *, use_bf16=True):
    """x: (B, T, D) float32 (batch_first, like the PyTorch module).

    layer_params: list of (w_ih (4H,in_l), w_hh (4H,H), b_ih (4H,), b_hh (4H,))
    fc_w: (D_out, H), fc_b: (D_out,)
    Returns pred: (B, D_out) float32.
    """
    B, T, D = x.shape
    H = hidden_dim
    L = len(layer_params)
    D_out = fc_w.shape[0]
    mm_dtype = jnp.bfloat16 if use_bf16 else jnp.float32

    # Pad batch up to a full sublane group so per-step tiles are unmasked.
    B_pad = max(8, ((B + 7) // 8) * 8)

    x_tbd = jnp.transpose(x, (1, 0, 2)).astype(jnp.float32)      # (T, B, D)
    if B_pad != B:
        x_tbd = jnp.pad(x_tbd, ((0, 0), (0, B_pad - B), (0, 0)))
    x_flat = x_tbd.reshape(T * B_pad, D).astype(mm_dtype)        # time-major, flat

    # Gate-reordered (i, f, o, g), transposed weights.
    w_ihT, w_hhT, biases = [], [], []
    for (w_ih, w_hh, b_ih, b_hh) in layer_params:
        w_ihT.append(_reorder_gates(jnp.asarray(w_ih, jnp.float32), H).T)   # (in_l,4H)
        w_hhT.append(_reorder_gates(jnp.asarray(w_hh, jnp.float32), H).T)   # (H,4H)
        biases.append(_reorder_gates(
            jnp.asarray(b_ih, jnp.float32) + jnp.asarray(b_hh, jnp.float32), H
        ).reshape(1, 4 * H))

    inputs = [x_flat, w_ihT[0].astype(mm_dtype)]
    in_specs = [_full_spec(x_flat.shape), _full_spec(w_ihT[0].shape)]
    for l in range(L):
        if l + 1 < L:
            # Fused RHS: this layer's recurrence + next layer's input proj.
            R_l = jnp.concatenate([w_hhT[l], w_ihT[l + 1]], axis=1)   # (H, 8H)
        else:
            R_l = w_hhT[l]                                            # (H, 4H)
        R_l = R_l.astype(mm_dtype)
        inputs += [R_l, biases[l]]
        in_specs += [_full_spec(R_l.shape), _full_spec(biases[l].shape)]

    fc_wT = jnp.asarray(fc_w, jnp.float32).T.astype(mm_dtype)    # (H, D_out)
    fc_b2 = jnp.asarray(fc_b, jnp.float32).reshape(1, D_out)
    inputs += [fc_wT, fc_b2]
    in_specs += [_full_spec(fc_wT.shape), _full_spec(fc_b2.shape)]

    kernel = _make_kernel(L, H, B_pad, T, mm_dtype)

    out_pad = pl.pallas_call(
        kernel,
        out_shape=jax.ShapeDtypeStruct((B_pad, D_out), jnp.float32),
        grid_spec=pltpu.PrefetchScalarGridSpec(
            num_scalar_prefetch=0,
            grid=(1,),
            in_specs=in_specs,
            out_specs=_full_spec((B_pad, D_out)),
        ),
        compiler_params=pltpu.CompilerParams(
            dimension_semantics=("arbitrary",),
            vmem_limit_bytes=4 * 1024 * 1024,   # actual footprint << 1 MiB
        ),
    )(*inputs)

    return out_pad[:B]


def lstm_model_ref(x, layer_params, fc_w, fc_b, hidden_dim):
    """Pure-JAX reference matching PyTorch nn.LSTM + Linear semantics."""
    B, T, D = x.shape
    H = hidden_dim
    out = x.astype(jnp.float32)
    for (w_ih, w_hh, b_ih, b_hh) in layer_params:
        h = jnp.zeros((B, H), jnp.float32)
        c = jnp.zeros((B, H), jnp.float32)
        hs = []
        for t in range(T):
            gates = out[:, t, :] @ w_ih.T + b_ih + h @ w_hh.T + b_hh
            i = jax.nn.sigmoid(gates[:, :H])
            f = jax.nn.sigmoid(gates[:, H:2 * H])
            g = jnp.tanh(gates[:, 2 * H:3 * H])
            o = jax.nn.sigmoid(gates[:, 3 * H:])
            c = f * c + i * g
            h = o * jnp.tanh(c)
            hs.append(h)
        out = jnp.stack(hs, axis=1)
    return out[:, -1, :] @ fc_w.T + fc_b


def init_params(key, input_dim, hidden_dim, num_layers):
    """Deterministic init, uniform(-1/sqrt(H), 1/sqrt(H)) like PyTorch LSTM."""
    k = 1.0 / jnp.sqrt(jnp.float32(hidden_dim))
    layer_params = []
    for li in range(num_layers):
        in_l = input_dim if li == 0 else hidden_dim
        key, k1, k2, k3, k4 = jax.random.split(key, 5)
        w_ih = jax.random.uniform(k1, (4 * hidden_dim, in_l), jnp.float32, -k, k)
        w_hh = jax.random.uniform(k2, (4 * hidden_dim, hidden_dim), jnp.float32, -k, k)
        b_ih = jax.random.uniform(k3, (4 * hidden_dim,), jnp.float32, -k, k)
        b_hh = jax.random.uniform(k4, (4 * hidden_dim,), jnp.float32, -k, k)
        layer_params.append((w_ih, w_hh, b_ih, b_hh))
    key, k5, k6 = jax.random.split(key, 3)
    kf = 1.0 / jnp.sqrt(jnp.float32(hidden_dim))
    fc_w = jax.random.uniform(k5, (input_dim, hidden_dim), jnp.float32, -kf, kf)
    fc_b = jax.random.uniform(k6, (input_dim,), jnp.float32, -kf, kf)
    return key, layer_params, fc_w, fc_b


if __name__ == "__main__":
    # CFG-equivalent small config
    B, T = 2, 8
    input_dim, hidden_dim, num_layers = 16, 32, 2

    key = jax.random.PRNGKey(0)
    key, layer_params, fc_w, fc_b = init_params(key, input_dim, hidden_dim, num_layers)
    key, kx = jax.random.split(key)
    x = jax.random.normal(kx, (B, T, input_dim), jnp.float32)

    ref = lstm_model_ref(x, layer_params, fc_w, fc_b, hidden_dim)

    # f32-matmul path: tight check of the fused-RHS / wavefront structure.
    pred_f32 = jax.block_until_ready(
        lstm_model_forward(x, layer_params, fc_w, fc_b, hidden_dim, use_bf16=False))
    assert pred_f32.shape == (B, input_dim)
    assert jnp.allclose(pred_f32, ref, atol=1e-3, rtol=1e-3), (
        f"f32 mismatch: max abs err {jnp.max(jnp.abs(pred_f32 - ref))}")

    # Default bf16-MXU-input path (f32 state & accumulation).
    pred = jax.block_until_ready(
        lstm_model_forward(x, layer_params, fc_w, fc_b, hidden_dim, use_bf16=True))
    assert pred.shape == (B, input_dim)
    assert jnp.allclose(pred, ref, atol=2e-2, rtol=2e-2), (
        f"bf16 mismatch: max abs err {jnp.max(jnp.abs(pred - ref))}")

    print("KERNEL_OK")
</pallas_src>

<mosaic_0001>
module attributes {stable_mosaic.version = 11 : i64} {
  func.func @kernel(%arg0: i32, %arg1: memref<64x16xf32, #tpu.memory_space<vmem>>, %arg2: memref<16x128xf32, #tpu.memory_space<vmem>>, %arg3: memref<32x256xf32, #tpu.memory_space<vmem>>, %arg4: memref<1x128xf32, #tpu.memory_space<vmem>>, %arg5: memref<32x128xf32, #tpu.memory_space<vmem>>, %arg6: memref<1x128xf32, #tpu.memory_space<vmem>>, %arg7: memref<32x16xf32, #tpu.memory_space<vmem>>, %arg8: memref<1x16xf32, #tpu.memory_space<vmem>>, %arg9: memref<8x16xf32, #tpu.memory_space<vmem>>) attributes {dimension_semantics = [#tpu.dimension_semantics<arbitrary>], iteration_bounds = array<i64: 1>, scalar_prefetch = 0 : i64, scratch_operands = 0 : i64, tpu.core_type = #tpu.core_type<tc>, window_params = [{pipeline_mode = #tpu.pipeline_mode<synchronous>, transform_indices = @transform_0, window_bounds = array<i64: 64, 16>}, {pipeline_mode = #tpu.pipeline_mode<synchronous>, transform_indices = @transform_1, window_bounds = array<i64: 16, 128>}, {pipeline_mode = #tpu.pipeline_mode<synchronous>, transform_indices = @transform_2, window_bounds = array<i64: 32, 256>}, {pipeline_mode = #tpu.pipeline_mode<synchronous>, transform_indices = @transform_3, window_bounds = array<i64: 1, 128>}, {pipeline_mode = #tpu.pipeline_mode<synchronous>, transform_indices = @transform_4, window_bounds = array<i64: 32, 128>}, {pipeline_mode = #tpu.pipeline_mode<synchronous>, transform_indices = @transform_5, window_bounds = array<i64: 1, 128>}, {pipeline_mode = #tpu.pipeline_mode<synchronous>, transform_indices = @transform_6, window_bounds = array<i64: 32, 16>}, {pipeline_mode = #tpu.pipeline_mode<synchronous>, transform_indices = @transform_7, window_bounds = array<i64: 1, 16>}, {pipeline_mode = #tpu.pipeline_mode<synchronous>, transform_indices = @transform_8, window_bounds = array<i64: 8, 16>}]} {
    %c0 = arith.constant 0 : index
    %c0_0 = arith.constant 0 : index
    %0 = vector.load %arg3[%c0, %c0_0] : memref<32x256xf32, #tpu.memory_space<vmem>>, vector<32x256xf32>
    %c0_1 = arith.constant 0 : index
    %c0_2 = arith.constant 0 : index
    %1 = vector.load %arg5[%c0_1, %c0_2] : memref<32x128xf32, #tpu.memory_space<vmem>>, vector<32x128xf32>
    %c0_3 = arith.constant 0 : index
    %c0_4 = arith.constant 0 : index
    %2 = vector.load %arg4[%c0_3, %c0_4] : memref<1x128xf32, #tpu.memory_space<vmem>>, vector<1x128xf32>
    %c0_5 = arith.constant 0 : index
    %c0_6 = arith.constant 0 : index
    %3 = vector.load %arg6[%c0_5, %c0_6] : memref<1x128xf32, #tpu.memory_space<vmem>>, vector<1x128xf32>
    %4 = tpu.iota {dimensions = array<i32: 1>} : vector<8x128xi32>
    %c96_i32 = arith.constant 96 : i32
    %5 = vector.broadcast %c96_i32 : i32 to vector<8x128xi32>
    %6 = arith.cmpi slt, %4, %5 : vector<8x128xi32>
    %c0_7 = arith.constant 0 : index
    %c0_8 = arith.constant 0 : index
    %7 = vector.load %arg1[%c0_7, %c0_8] : memref<64x16xf32, #tpu.memory_space<vmem>>, vector<64x16xf32>
    %c0_9 = arith.constant 0 : index
    %c0_10 = arith.constant 0 : index
    %8 = vector.load %arg2[%c0_9, %c0_10] : memref<16x128xf32, #tpu.memory_space<vmem>>, vector<16x128xf32>
    %cst = arith.constant dense<0.000000e+00> : vector<64x128xf32>
    %9 = tpu.matmul %7, %8, %cst {dimension_numbers = #tpu.dot_dimension_numbers<[1], [0], [0], [1], [0, 0, 1, 1], [], []>} : vector<64x16xf32>, vector<16x128xf32>, vector<64x128xf32> -> vector<64x128xf32>
    %10 = vector.extract_strided_slice %9 {offsets = [0, 0], sizes = [8, 128], strides = [1, 1]} : vector<64x128xf32> to vector<8x128xf32>
    %11 = vector.extract_strided_slice %9 {offsets = [8, 0], sizes = [8, 128], strides = [1, 1]} : vector<64x128xf32> to vector<8x128xf32>
    %12 = vector.extract_strided_slice %9 {offsets = [16, 0], sizes = [8, 128], strides = [1, 1]} : vector<64x128xf32> to vector<8x128xf32>
    %13 = vector.extract_strided_slice %9 {offsets = [24, 0], sizes = [8, 128], strides = [1, 1]} : vector<64x128xf32> to vector<8x128xf32>
    %14 = vector.extract_strided_slice %9 {offsets = [32, 0], sizes = [8, 128], strides = [1, 1]} : vector<64x128xf32> to vector<8x128xf32>
    %15 = vector.extract_strided_slice %9 {offsets = [40, 0], sizes = [8, 128], strides = [1, 1]} : vector<64x128xf32> to vector<8x128xf32>
    %16 = vector.extract_strided_slice %9 {offsets = [48, 0], sizes = [8, 128], strides = [1, 1]} : vector<64x128xf32> to vector<8x128xf32>
    %17 = vector.extract_strided_slice %9 {offsets = [56, 0], sizes = [8, 128], strides = [1, 1]} : vector<64x128xf32> to vector<8x128xf32>
    %18 = vector.broadcast %2 : vector<1x128xf32> to vector<8x128xf32>
    %19 = arith.addf %10, %18 : vector<8x128xf32>
    %20 = arith.negf %19 : vector<8x128xf32>
    %21 = math.exp %20 : vector<8x128xf32>
    %cst_11 = arith.constant 1.000000e+00 : f32
    %22 = vector.broadcast %cst_11 : f32 to vector<8x128xf32>
    %23 = arith.addf %22, %21 : vector<8x128xf32>
    %24 = arith.divf %22, %23 : vector<8x128xf32>
    %25 = math.tanh %19 : vector<8x128xf32>
    %26 = arith.select %6, %24, %25 : vector<8x128xi1>, vector<8x128xf32>
    %27 = vector.extract_strided_slice %26 {offsets = [0, 0], sizes = [8, 32], strides = [1, 1]} : vector<8x128xf32> to vector<8x32xf32>
    %28 = vector.extract_strided_slice %26 {offsets = [0, 64], sizes = [8, 32], strides = [1, 1]} : vector<8x128xf32> to vector<8x32xf32>
    %29 = vector.extract_strided_slice %26 {offsets = [0, 96], sizes = [8, 32], strides = [1, 1]} : vector<8x128xf32> to vector<8x32xf32>
    %30 = arith.mulf %27, %29 : vector<8x32xf32>
    %31 = math.tanh %30 : vector<8x32xf32>
    %32 = arith.mulf %28, %31 : vector<8x32xf32>
    %33 = vector.broadcast %2 : vector<1x128xf32> to vector<8x128xf32>
    %34 = arith.addf %11, %33 : vector<8x128xf32>
    %cst_12 = arith.constant dense<0.000000e+00> : vector<8x256xf32>
    %35 = tpu.matmul %32, %0, %cst_12 {dimension_numbers = #tpu.dot_dimension_numbers<[1], [0], [0], [1], [0, 0, 1, 1], [], []>} : vector<8x32xf32>, vector<32x256xf32>, vector<8x256xf32> -> vector<8x256xf32>
    %36 = vector.extract_strided_slice %35 {offsets = [0, 0], sizes = [8, 128], strides = [1, 1]} : vector<8x256xf32> to vector<8x128xf32>
    %37 = arith.addf %34, %36 : vector<8x128xf32>
    %38 = vector.extract_strided_slice %35 {offsets = [0, 128], sizes = [8, 128], strides = [1, 1]} : vector<8x256xf32> to vector<8x128xf32>
    %39 = arith.negf %37 : vector<8x128xf32>
    %40 = math.exp %39 : vector<8x128xf32>
    %cst_13 = arith.constant 1.000000e+00 : f32
    %41 = vector.broadcast %cst_13 : f32 to vector<8x128xf32>
    %42 = arith.addf %41, %40 : vector<8x128xf32>
    %43 = arith.divf %41, %42 : vector<8x128xf32>
    %44 = math.tanh %37 : vector<8x128xf32>
    %45 = arith.select %6, %43, %44 : vector<8x128xi1>, vector<8x128xf32>
    %46 = vector.extract_strided_slice %45 {offsets = [0, 0], sizes = [8, 32], strides = [1, 1]} : vector<8x128xf32> to vector<8x32xf32>
    %47 = vector.extract_strided_slice %45 {offsets = [0, 32], sizes = [8, 32], strides = [1, 1]} : vector<8x128xf32> to vector<8x32xf32>
    %48 = vector.extract_strided_slice %45 {offsets = [0, 64], sizes = [8, 32], strides = [1, 1]} : vector<8x128xf32> to vector<8x32xf32>
    %49 = vector.extract_strided_slice %45 {offsets = [0, 96], sizes = [8, 32], strides = [1, 1]} : vector<8x128xf32> to vector<8x32xf32>
    %50 = arith.mulf %47, %30 : vector<8x32xf32>
    %51 = arith.mulf %46, %49 : vector<8x32xf32>
    %52 = arith.addf %50, %51 : vector<8x32xf32>
    %53 = math.tanh %52 : vector<8x32xf32>
    %54 = arith.mulf %48, %53 : vector<8x32xf32>
    %55 = vector.broadcast %2 : vector<1x128xf32> to vector<8x128xf32>
    %56 = arith.addf %12, %55 : vector<8x128xf32>
    %cst_14 = arith.constant dense<0.000000e+00> : vector<8x256xf32>
    %57 = tpu.matmul %54, %0, %cst_14 {dimension_numbers = #tpu.dot_dimension_numbers<[1], [0], [0], [1], [0, 0, 1, 1], [], []>} : vector<8x32xf32>, vector<32x256xf32>, vector<8x256xf32> -> vector<8x256xf32>
    %58 = vector.extract_strided_slice %57 {offsets = [0, 0], sizes = [8, 128], strides = [1, 1]} : vector<8x256xf32> to vector<8x128xf32>
    %59 = arith.addf %56, %58 : vector<8x128xf32>
    %60 = vector.extract_strided_slice %57 {offsets = [0, 128], sizes = [8, 128], strides = [1, 1]} : vector<8x256xf32> to vector<8x128xf32>
    %61 = arith.negf %59 : vector<8x128xf32>
    %62 = math.exp %61 : vector<8x128xf32>
    %cst_15 = arith.constant 1.000000e+00 : f32
    %63 = vector.broadcast %cst_15 : f32 to vector<8x128xf32>
    %64 = arith.addf %63, %62 : vector<8x128xf32>
    %65 = arith.divf %63, %64 : vector<8x128xf32>
    %66 = math.tanh %59 : vector<8x128xf32>
    %67 = arith.select %6, %65, %66 : vector<8x128xi1>, vector<8x128xf32>
    %68 = vector.extract_strided_slice %67 {offsets = [0, 0], sizes = [8, 32], strides = [1, 1]} : vector<8x128xf32> to vector<8x32xf32>
    %69 = vector.extract_strided_slice %67 {offsets = [0, 32], sizes = [8, 32], strides = [1, 1]} : vector<8x128xf32> to vector<8x32xf32>
    %70 = vector.extract_strided_slice %67 {offsets = [0, 64], sizes = [8, 32], strides = [1, 1]} : vector<8x128xf32> to vector<8x32xf32>
    %71 = vector.extract_strided_slice %67 {offsets = [0, 96], sizes = [8, 32], strides = [1, 1]} : vector<8x128xf32> to vector<8x32xf32>
    %72 = arith.mulf %69, %52 : vector<8x32xf32>
    %73 = arith.mulf %68, %71 : vector<8x32xf32>
    %74 = arith.addf %72, %73 : vector<8x32xf32>
    %75 = math.tanh %74 : vector<8x32xf32>
    %76 = arith.mulf %70, %75 : vector<8x32xf32>
    %77 = vector.broadcast %3 : vector<1x128xf32> to vector<8x128xf32>
    %78 = arith.addf %38, %77 : vector<8x128xf32>
    %79 = arith.negf %78 : vector<8x128xf32>
    %80 = math.exp %79 : vector<8x128xf32>
    %cst_16 = arith.constant 1.000000e+00 : f32
    %81 = vector.broadcast %cst_16 : f32 to vector<8x128xf32>
    %82 = arith.addf %81, %80 : vector<8x128xf32>
    %83 = arith.divf %81, %82 : vector<8x128xf32>
    %84 = math.tanh %78 : vector<8x128xf32>
    %85 = arith.select %6, %83, %84 : vector<8x128xi1>, vector<8x128xf32>
    %86 = vector.extract_strided_slice %85 {offsets = [0, 0], sizes = [8, 32], strides = [1, 1]} : vector<8x128xf32> to vector<8x32xf32>
    %87 = vector.extract_strided_slice %85 {offsets = [0, 64], sizes = [8, 32], strides = [1, 1]} : vector<8x128xf32> to vector<8x32xf32>
    %88 = vector.extract_strided_slice %85 {offsets = [0, 96], sizes = [8, 32], strides = [1, 1]} : vector<8x128xf32> to vector<8x32xf32>
    %89 = arith.mulf %86, %88 : vector<8x32xf32>
    %90 = math.tanh %89 : vector<8x32xf32>
    %91 = arith.mulf %87, %90 : vector<8x32xf32>
    %92 = vector.broadcast %2 : vector<1x128xf32> to vector<8x128xf32>
    %93 = arith.addf %13, %92 : vector<8x128xf32>
    %cst_17 = arith.constant dense<0.000000e+00> : vector<8x256xf32>
    %94 = tpu.matmul %76, %0, %cst_17 {dimension_numbers = #tpu.dot_dimension_numbers<[1], [0], [0], [1], [0, 0, 1, 1], [], []>} : vector<8x32xf32>, vector<32x256xf32>, vector<8x256xf32> -> vector<8x256xf32>
    %95 = vector.extract_strided_slice %94 {offsets = [0, 0], sizes = [8, 128], strides = [1, 1]} : vector<8x256xf32> to vector<8x128xf32>
    %96 = arith.addf %93, %95 : vector<8x128xf32>
    %97 = vector.extract_strided_slice %94 {offsets = [0, 128], sizes = [8, 128], strides = [1, 1]} : vector<8x256xf32> to vector<8x128xf32>
    %98 = arith.negf %96 : vector<8x128xf32>
    %99 = math.exp %98 : vector<8x128xf32>
    %cst_18 = arith.constant 1.000000e+00 : f32
    %100 = vector.broadcast %cst_18 : f32 to vector<8x128xf32>
    %101 = arith.addf %100, %99 : vector<8x128xf32>
    %102 = arith.divf %100, %101 : vector<8x128xf32>
    %103 = math.tanh %96 : vector<8x128xf32>
    %104 = arith.select %6, %102, %103 : vector<8x128xi1>, vector<8x128xf32>
    %105 = vector.extract_strided_slice %104 {offsets = [0, 0], sizes = [8, 32], strides = [1, 1]} : vector<8x128xf32> to vector<8x32xf32>
    %106 = vector.extract_strided_slice %104 {offsets = [0, 32], sizes = [8, 32], strides = [1, 1]} : vector<8x128xf32> to vector<8x32xf32>
    %107 = vector.extract_strided_slice %104 {offsets = [0, 64], sizes = [8, 32], strides = [1, 1]} : vector<8x128xf32> to vector<8x32xf32>
    %108 = vector.extract_strided_slice %104 {offsets = [0, 96], sizes = [8, 32], strides = [1, 1]} : vector<8x128xf32> to vector<8x32xf32>
    %109 = arith.mulf %106, %74 : vector<8x32xf32>
    %110 = arith.mulf %105, %108 : vector<8x32xf32>
    %111 = arith.addf %109, %110 : vector<8x32xf32>
    %112 = math.tanh %111 : vector<8x32xf32>
    %113 = arith.mulf %107, %112 : vector<8x32xf32>
    %114 = vector.broadcast %3 : vector<1x128xf32> to vector<8x128xf32>
    %115 = arith.addf %60, %114 : vector<8x128xf32>
    %cst_19 = arith.constant dense<0.000000e+00> : vector<8x128xf32>
    %116 = tpu.matmul %91, %1, %cst_19 {dimension_numbers = #tpu.dot_dimension_numbers<[1], [0], [0], [1], [0, 0, 1, 1], [], []>} : vector<8x32xf32>, vector<32x128xf32>, vector<8x128xf32> -> vector<8x128xf32>
    %117 = arith.addf %115, %116 : vector<8x128xf32>
    %118 = arith.negf %117 : vector<8x128xf32>
    %119 = math.exp %118 : vector<8x128xf32>
    %cst_20 = arith.constant 1.000000e+00 : f32
    %120 = vector.broadcast %cst_20 : f32 to vector<8x128xf32>
    %121 = arith.addf %120, %119 : vector<8x128xf32>
    %122 = arith.divf %120, %121 : vector<8x128xf32>
    %123 = math.tanh %117 : vector<8x128xf32>
    %124 = arith.select %6, %122, %123 : vector<8x128xi1>, vector<8x128xf32>
    %125 = vector.extract_strided_slice %124 {offsets = [0, 0], sizes = [8, 32], strides = [1, 1]} : vector<8x128xf32> to vector<8x32xf32>
    %126 = vector.extract_strided_slice %124 {offsets = [0, 32], sizes = [8, 32], strides = [1, 1]} : vector<8x128xf32> to vector<8x32xf32>
    %127 = vector.extract_strided_slice %124 {offsets = [0, 64], sizes = [8, 32], strides = [1, 1]} : vector<8x128xf32> to vector<8x32xf32>
    %128 = vector.extract_strided_slice %124 {offsets = [0, 96], sizes = [8, 32], strides = [1, 1]} : vector<8x128xf32> to vector<8x32xf32>
    %129 = arith.mulf %126, %89 : vector<8x32xf32>
    %130 = arith.mulf %125, %128 : vector<8x32xf32>
    %131 = arith.addf %129, %130 : vector<8x32xf32>
    %132 = math.tanh %131 : vector<8x32xf32>
    %133 = arith.mulf %127, %132 : vector<8x32xf32>
    %134 = vector.broadcast %2 : vector<1x128xf32> to vector<8x128xf32>
    %135 = arith.addf %14, %134 : vector<8x128xf32>
    %cst_21 = arith.constant dense<0.000000e+00> : vector<8x256xf32>
    %136 = tpu.matmul %113, %0, %cst_21 {dimension_numbers = #tpu.dot_dimension_numbers<[1], [0], [0], [1], [0, 0, 1, 1], [], []>} : vector<8x32xf32>, vector<32x256xf32>, vector<8x256xf32> -> vector<8x256xf32>
    %137 = vector.extract_strided_slice %136 {offsets = [0, 0], sizes = [8, 128], strides = [1, 1]} : vector<8x256xf32> to vector<8x128xf32>
    %138 = arith.addf %135, %137 : vector<8x128xf32>
    %139 = vector.extract_strided_slice %136 {offsets = [0, 128], sizes = [8, 128], strides = [1, 1]} : vector<8x256xf32> to vector<8x128xf32>
    %140 = arith.negf %138 : vector<8x128xf32>
    %141 = math.exp %140 : vector<8x128xf32>
    %cst_22 = arith.constant 1.000000e+00 : f32
    %142 = vector.broadcast %cst_22 : f32 to vector<8x128xf32>
    %143 = arith.addf %142, %141 : vector<8x128xf32>
    %144 = arith.divf %142, %143 : vector<8x128xf32>
    %145 = math.tanh %138 : vector<8x128xf32>
    %146 = arith.select %6, %144, %145 : vector<8x128xi1>, vector<8x128xf32>
    %147 = vector.extract_strided_slice %146 {offsets = [0, 0], sizes = [8, 32], strides = [1, 1]} : vector<8x128xf32> to vector<8x32xf32>
    %148 = vector.extract_strided_slice %146 {offsets = [0, 32], sizes = [8, 32], strides = [1, 1]} : vector<8x128xf32> to vector<8x32xf32>
    %149 = vector.extract_strided_slice %146 {offsets = [0, 64], sizes = [8, 32], strides = [1, 1]} : vector<8x128xf32> to vector<8x32xf32>
    %150 = vector.extract_strided_slice %146 {offsets = [0, 96], sizes = [8, 32], strides = [1, 1]} : vector<8x128xf32> to vector<8x32xf32>
    %151 = arith.mulf %148, %111 : vector<8x32xf32>
    %152 = arith.mulf %147, %150 : vector<8x32xf32>
    %153 = arith.addf %151, %152 : vector<8x32xf32>
    %154 = math.tanh %153 : vector<8x32xf32>
    %155 = arith.mulf %149, %154 : vector<8x32xf32>
    %156 = vector.broadcast %3 : vector<1x128xf32> to vector<8x128xf32>
    %157 = arith.addf %97, %156 : vector<8x128xf32>
    %cst_23 = arith.constant dense<0.000000e+00> : vector<8x128xf32>
    %158 = tpu.matmul %133, %1, %cst_23 {dimension_numbers = #tpu.dot_dimension_numbers<[1], [0], [0], [1], [0, 0, 1, 1], [], []>} : vector<8x32xf32>, vector<32x128xf32>, vector<8x128xf32> -> vector<8x128xf32>
    %159 = arith.addf %157, %158 : vector<8x128xf32>
    %160 = arith.negf %159 : vector<8x128xf32>
    %161 = math.exp %160 : vector<8x128xf32>
    %cst_24 = arith.constant 1.000000e+00 : f32
    %162 = vector.broadcast %cst_24 : f32 to vector<8x128xf32>
    %163 = arith.addf %162, %161 : vector<8x128xf32>
    %164 = arith.divf %162, %163 : vector<8x128xf32>
    %165 = math.tanh %159 : vector<8x128xf32>
    %166 = arith.select %6, %164, %165 : vector<8x128xi1>, vector<8x128xf32>
    %167 = vector.extract_strided_slice %166 {offsets = [0, 0], sizes = [8, 32], strides = [1, 1]} : vector<8x128xf32> to vector<8x32xf32>
    %168 = vector.extract_strided_slice %166 {offsets = [0, 32], sizes = [8, 32], strides = [1, 1]} : vector<8x128xf32> to vector<8x32xf32>
    %169 = vector.extract_strided_slice %166 {offsets = [0, 64], sizes = [8, 32], strides = [1, 1]} : vector<8x128xf32> to vector<8x32xf32>
    %170 = vector.extract_strided_slice %166 {offsets = [0, 96], sizes = [8, 32], strides = [1, 1]} : vector<8x128xf32> to vector<8x32xf32>
    %171 = arith.mulf %168, %131 : vector<8x32xf32>
    %172 = arith.mulf %167, %170 : vector<8x32xf32>
    %173 = arith.addf %171, %172 : vector<8x32xf32>
    %174 = math.tanh %173 : vector<8x32xf32>
    %175 = arith.mulf %169, %174 : vector<8x32xf32>
    %176 = vector.broadcast %2 : vector<1x128xf32> to vector<8x128xf32>
    %177 = arith.addf %15, %176 : vector<8x128xf32>
    %cst_25 = arith.constant dense<0.000000e+00> : vector<8x256xf32>
    %178 = tpu.matmul %155, %0, %cst_25 {dimension_numbers = #tpu.dot_dimension_numbers<[1], [0], [0], [1], [0, 0, 1, 1], [], []>} : vector<8x32xf32>, vector<32x256xf32>, vector<8x256xf32> -> vector<8x256xf32>
    %179 = vector.extract_strided_slice %178 {offsets = [0, 0], sizes = [8, 128], strides = [1, 1]} : vector<8x256xf32> to vector<8x128xf32>
    %180 = arith.addf %177, %179 : vector<8x128xf32>
    %181 = vector.extract_strided_slice %178 {offsets = [0, 128], sizes = [8, 128], strides = [1, 1]} : vector<8x256xf32> to vector<8x128xf32>
    %182 = arith.negf %180 : vector<8x128xf32>
    %183 = math.exp %182 : vector<8x128xf32>
    %cst_26 = arith.constant 1.000000e+00 : f32
    %184 = vector.broadcast %cst_26 : f32 to vector<8x128xf32>
    %185 = arith.addf %184, %183 : vector<8x128xf32>
    %186 = arith.divf %184, %185 : vector<8x128xf32>
    %187 = math.tanh %180 : vector<8x128xf32>
    %188 = arith.select %6, %186, %187 : vector<8x128xi1>, vector<8x128xf32>
    %189 = vector.extract_strided_slice %188 {offsets = [0, 0], sizes = [8, 32], strides = [1, 1]} : vector<8x128xf32> to vector<8x32xf32>
    %190 = vector.extract_strided_slice %188 {offsets = [0, 32], sizes = [8, 32], strides = [1, 1]} : vector<8x128xf32> to vector<8x32xf32>
    %191 = vector.extract_strided_slice %188 {offsets = [0, 64], sizes = [8, 32], strides = [1, 1]} : vector<8x128xf32> to vector<8x32xf32>
    %192 = vector.extract_strided_slice %188 {offsets = [0, 96], sizes = [8, 32], strides = [1, 1]} : vector<8x128xf32> to vector<8x32xf32>
    %193 = arith.mulf %190, %153 : vector<8x32xf32>
    %194 = arith.mulf %189, %192 : vector<8x32xf32>
    %195 = arith.addf %193, %194 : vector<8x32xf32>
    %196 = math.tanh %195 : vector<8x32xf32>
    %197 = arith.mulf %191, %196 : vector<8x32xf32>
    %198 = vector.broadcast %3 : vector<1x128xf32> to vector<8x128xf32>
    %199 = arith.addf %139, %198 : vector<8x128xf32>
    %cst_27 = arith.constant dense<0.000000e+00> : vector<8x128xf32>
    %200 = tpu.matmul %175, %1, %cst_27 {dimension_numbers = #tpu.dot_dimension_numbers<[1], [0], [0], [1], [0, 0, 1, 1], [], []>} : vector<8x32xf32>, vector<32x128xf32>, vector<8x128xf32> -> vector<8x128xf32>
    %201 = arith.addf %199, %200 : vector<8x128xf32>
    %202 = arith.negf %201 : vector<8x128xf32>
    %203 = math.exp %202 : vector<8x128xf32>
    %cst_28 = arith.constant 1.000000e+00 : f32
    %204 = vector.broadcast %cst_28 : f32 to vector<8x128xf32>
    %205 = arith.addf %204, %203 : vector<8x128xf32>
    %206 = arith.divf %204, %205 : vector<8x128xf32>
    %207 = math.tanh %201 : vector<8x128xf32>
    %208 = arith.select %6, %206, %207 : vector<8x128xi1>, vector<8x128xf32>
    %209 = vector.extract_strided_slice %208 {offsets = [0, 0], sizes = [8, 32], strides = [1, 1]} : vector<8x128xf32> to vector<8x32xf32>
    %210 = vector.extract_strided_slice %208 {offsets = [0, 32], sizes = [8, 32], strides = [1, 1]} : vector<8x128xf32> to vector<8x32xf32>
    %211 = vector.extract_strided_slice %208 {offsets = [0, 64], sizes = [8, 32], strides = [1, 1]} : vector<8x128xf32> to vector<8x32xf32>
    %212 = vector.extract_strided_slice %208 {offsets = [0, 96], sizes = [8, 32], strides = [1, 1]} : vector<8x128xf32> to vector<8x32xf32>
    %213 = arith.mulf %210, %173 : vector<8x32xf32>
    %214 = arith.mulf %209, %212 : vector<8x32xf32>
    %215 = arith.addf %213, %214 : vector<8x32xf32>
    %216 = math.tanh %215 : vector<8x32xf32>
    %217 = arith.mulf %211, %216 : vector<8x32xf32>
    %218 = vector.broadcast %2 : vector<1x128xf32> to vector<8x128xf32>
    %219 = arith.addf %16, %218 : vector<8x128xf32>
    %cst_29 = arith.constant dense<0.000000e+00> : vector<8x256xf32>
    %220 = tpu.matmul %197, %0, %cst_29 {dimension_numbers = #tpu.dot_dimension_numbers<[1], [0], [0], [1], [0, 0, 1, 1], [], []>} : vector<8x32xf32>, vector<32x256xf32>, vector<8x256xf32> -> vector<8x256xf32>
    %221 = vector.extract_strided_slice %220 {offsets = [0, 0], sizes = [8, 128], strides = [1, 1]} : vector<8x256xf32> to vector<8x128xf32>
    %222 = arith.addf %219, %221 : vector<8x128xf32>
    %223 = vector.extract_strided_slice %220 {offsets = [0, 128], sizes = [8, 128], strides = [1, 1]} : vector<8x256xf32> to vector<8x128xf32>
    %224 = arith.negf %222 : vector<8x128xf32>
    %225 = math.exp %224 : vector<8x128xf32>
    %cst_30 = arith.constant 1.000000e+00 : f32
    %226 = vector.broadcast %cst_30 : f32 to vector<8x128xf32>
    %227 = arith.addf %226, %225 : vector<8x128xf32>
    %228 = arith.divf %226, %227 : vector<8x128xf32>
    %229 = math.tanh %222 : vector<8x128xf32>
    %230 = arith.select %6, %228, %229 : vector<8x128xi1>, vector<8x128xf32>
    %231 = vector.extract_strided_slice %230 {offsets = [0, 0], sizes = [8, 32], strides = [1, 1]} : vector<8x128xf32> to vector<8x32xf32>
    %232 = vector.extract_strided_slice %230 {offsets = [0, 32], sizes = [8, 32], strides = [1, 1]} : vector<8x128xf32> to vector<8x32xf32>
    %233 = vector.extract_strided_slice %230 {offsets = [0, 64], sizes = [8, 32], strides = [1, 1]} : vector<8x128xf32> to vector<8x32xf32>
    %234 = vector.extract_strided_slice %230 {offsets = [0, 96], sizes = [8, 32], strides = [1, 1]} : vector<8x128xf32> to vector<8x32xf32>
    %235 = arith.mulf %232, %195 : vector<8x32xf32>
    %236 = arith.mulf %231, %234 : vector<8x32xf32>
    %237 = arith.addf %235, %236 : vector<8x32xf32>
    %238 = math.tanh %237 : vector<8x32xf32>
    %239 = arith.mulf %233, %238 : vector<8x32xf32>
    %240 = vector.broadcast %3 : vector<1x128xf32> to vector<8x128xf32>
    %241 = arith.addf %181, %240 : vector<8x128xf32>
    %cst_31 = arith.constant dense<0.000000e+00> : vector<8x128xf32>
    %242 = tpu.matmul %217, %1, %cst_31 {dimension_numbers = #tpu.dot_dimension_numbers<[1], [0], [0], [1], [0, 0, 1, 1], [], []>} : vector<8x32xf32>, vector<32x128xf32>, vector<8x128xf32> -> vector<8x128xf32>
    %243 = arith.addf %241, %242 : vector<8x128xf32>
    %244 = arith.negf %243 : vector<8x128xf32>
    %245 = math.exp %244 : vector<8x128xf32>
    %cst_32 = arith.constant 1.000000e+00 : f32
    %246 = vector.broadcast %cst_32 : f32 to vector<8x128xf32>
    %247 = arith.addf %246, %245 : vector<8x128xf32>
    %248 = arith.divf %246, %247 : vector<8x128xf32>
    %249 = math.tanh %243 : vector<8x128xf32>
    %250 = arith.select %6, %248, %249 : vector<8x128xi1>, vector<8x128xf32>
    %251 = vector.extract_strided_slice %250 {offsets = [0, 0], sizes = [8, 32], strides = [1, 1]} : vector<8x128xf32> to vector<8x32xf32>
    %252 = vector.extract_strided_slice %250 {offsets = [0, 32], sizes = [8, 32], strides = [1, 1]} : vector<8x128xf32> to vector<8x32xf32>
    %253 = vector.extract_strided_slice %250 {offsets = [0, 64], sizes = [8, 32], strides = [1, 1]} : vector<8x128xf32> to vector<8x32xf32>
    %254 = vector.extract_strided_slice %250 {offsets = [0, 96], sizes = [8, 32], strides = [1, 1]} : vector<8x128xf32> to vector<8x32xf32>
    %255 = arith.mulf %252, %215 : vector<8x32xf32>
    %256 = arith.mulf %251, %254 : vector<8x32xf32>
    %257 = arith.addf %255, %256 : vector<8x32xf32>
    %258 = math.tanh %257 : vector<8x32xf32>
    %259 = arith.mulf %253, %258 : vector<8x32xf32>
    %260 = vector.broadcast %2 : vector<1x128xf32> to vector<8x128xf32>
    %261 = arith.addf %17, %260 : vector<8x128xf32>
    %cst_33 = arith.constant dense<0.000000e+00> : vector<8x256xf32>
    %262 = tpu.matmul %239, %0, %cst_33 {dimension_numbers = #tpu.dot_dimension_numbers<[1], [0], [0], [1], [0, 0, 1, 1], [], []>} : vector<8x32xf32>, vector<32x256xf32>, vector<8x256xf32> -> vector<8x256xf32>
    %263 = vector.extract_strided_slice %262 {offsets = [0, 0], sizes = [8, 128], strides = [1, 1]} : vector<8x256xf32> to vector<8x128xf32>
    %264 = arith.addf %261, %263 : vector<8x128xf32>
    %265 = vector.extract_strided_slice %262 {offsets = [0, 128], sizes = [8, 128], strides = [1, 1]} : vector<8x256xf32> to vector<8x128xf32>
    %266 = arith.negf %264 : vector<8x128xf32>
    %267 = math.exp %266 : vector<8x128xf32>
    %cst_34 = arith.constant 1.000000e+00 : f32
    %268 = vector.broadcast %cst_34 : f32 to vector<8x128xf32>
    %269 = arith.addf %268, %267 : vector<8x128xf32>
    %270 = arith.divf %268, %269 : vector<8x128xf32>
    %271 = math.tanh %264 : vector<8x128xf32>
    %272 = arith.select %6, %270, %271 : vector<8x128xi1>, vector<8x128xf32>
    %273 = vector.extract_strided_slice %272 {offsets = [0, 0], sizes = [8, 32], strides = [1, 1]} : vector<8x128xf32> to vector<8x32xf32>
    %274 = vector.extract_strided_slice %272 {offsets = [0, 32], sizes = [8, 32], strides = [1, 1]} : vector<8x128xf32> to vector<8x32xf32>
    %275 = vector.extract_strided_slice %272 {offsets = [0, 64], sizes = [8, 32], strides = [1, 1]} : vector<8x128xf32> to vector<8x32xf32>
    %276 = vector.extract_strided_slice %272 {offsets = [0, 96], sizes = [8, 32], strides = [1, 1]} : vector<8x128xf32> to vector<8x32xf32>
    %277 = arith.mulf %274, %237 : vector<8x32xf32>
    %278 = arith.mulf %273, %276 : vector<8x32xf32>
    %279 = arith.addf %277, %278 : vector<8x32xf32>
    %280 = math.tanh %279 : vector<8x32xf32>
    %281 = arith.mulf %275, %280 : vector<8x32xf32>
    %282 = vector.extract_strided_slice %0 {offsets = [0, 128], sizes = [32, 128], strides = [1, 1]} : vector<32x256xf32> to vector<32x128xf32>
    %cst_35 = arith.constant dense<0.000000e+00> : vector<8x128xf32>
    %283 = tpu.matmul %281, %282, %cst_35 {dimension_numbers = #tpu.dot_dimension_numbers<[1], [0], [0], [1], [0, 0, 1, 1], [], []>} : vector<8x32xf32>, vector<32x128xf32>, vector<8x128xf32> -> vector<8x128xf32>
    %284 = vector.broadcast %3 : vector<1x128xf32> to vector<8x128xf32>
    %285 = arith.addf %223, %284 : vector<8x128xf32>
    %cst_36 = arith.constant dense<0.000000e+00> : vector<8x128xf32>
    %286 = tpu.matmul %259, %1, %cst_36 {dimension_numbers = #tpu.dot_dimension_numbers<[1], [0], [0], [1], [0, 0, 1, 1], [], []>} : vector<8x32xf32>, vector<32x128xf32>, vector<8x128xf32> -> vector<8x128xf32>
    %287 = arith.addf %285, %286 : vector<8x128xf32>
    %288 = arith.negf %287 : vector<8x128xf32>
    %289 = math.exp %288 : vector<8x128xf32>
    %cst_37 = arith.constant 1.000000e+00 : f32
    %290 = vector.broadcast %cst_37 : f32 to vector<8x128xf32>
    %291 = arith.addf %290, %289 : vector<8x128xf32>
    %292 = arith.divf %290, %291 : vector<8x128xf32>
    %293 = math.tanh %287 : vector<8x128xf32>
    %294 = arith.select %6, %292, %293 : vector<8x128xi1>, vector<8x128xf32>
    %295 = vector.extract_strided_slice %294 {offsets = [0, 0], sizes = [8, 32], strides = [1, 1]} : vector<8x128xf32> to vector<8x32xf32>
    %296 = vector.extract_strided_slice %294 {offsets = [0, 32], sizes = [8, 32], strides = [1, 1]} : vector<8x128xf32> to vector<8x32xf32>
    %297 = vector.extract_strided_slice %294 {offsets = [0, 64], sizes = [8, 32], strides = [1, 1]} : vector<8x128xf32> to vector<8x32xf32>
    %298 = vector.extract_strided_slice %294 {offsets = [0, 96], sizes = [8, 32], strides = [1, 1]} : vector<8x128xf32> to vector<8x32xf32>
    %299 = arith.mulf %296, %257 : vector<8x32xf32>
    %300 = arith.mulf %295, %298 : vector<8x32xf32>
    %301 = arith.addf %299, %300 : vector<8x32xf32>
    %302 = math.tanh %301 : vector<8x32xf32>
    %303 = arith.mulf %297, %302 : vector<8x32xf32>
    %304 = vector.broadcast %3 : vector<1x128xf32> to vector<8x128xf32>
    %305 = arith.addf %265, %304 : vector<8x128xf32>
    %cst_38 = arith.constant dense<0.000000e+00> : vector<8x128xf32>
    %306 = tpu.matmul %303, %1, %cst_38 {dimension_numbers = #tpu.dot_dimension_numbers<[1], [0], [0], [1], [0, 0, 1, 1], [], []>} : vector<8x32xf32>, vector<32x128xf32>, vector<8x128xf32> -> vector<8x128xf32>
    %307 = arith.addf %305, %306 : vector<8x128xf32>
    %308 = arith.negf %307 : vector<8x128xf32>
    %309 = math.exp %308 : vector<8x128xf32>
    %cst_39 = arith.constant 1.000000e+00 : f32
    %310 = vector.broadcast %cst_39 : f32 to vector<8x128xf32>
    %311 = arith.addf %310, %309 : vector<8x128xf32>
    %312 = arith.divf %310, %311 : vector<8x128xf32>
    %313 = math.tanh %307 : vector<8x128xf32>
    %314 = arith.select %6, %312, %313 : vector<8x128xi1>, vector<8x128xf32>
    %315 = vector.extract_strided_slice %314 {offsets = [0, 0], sizes = [8, 32], strides = [1, 1]} : vector<8x128xf32> to vector<8x32xf32>
    %316 = vector.extract_strided_slice %314 {offsets = [0, 32], sizes = [8, 32], strides = [1, 1]} : vector<8x128xf32> to vector<8x32xf32>
    %317 = vector.extract_strided_slice %314 {offsets = [0, 64], sizes = [8, 32], strides = [1, 1]} : vector<8x128xf32> to vector<8x32xf32>
    %318 = vector.extract_strided_slice %314 {offsets = [0, 96], sizes = [8, 32], strides = [1, 1]} : vector<8x128xf32> to vector<8x32xf32>
    %319 = arith.mulf %316, %301 : vector<8x32xf32>
    %320 = arith.mulf %315, %318 : vector<8x32xf32>
    %321 = arith.addf %319, %320 : vector<8x32xf32>
    %322 = math.tanh %321 : vector<8x32xf32>
    %323 = arith.mulf %317, %322 : vector<8x32xf32>
    %324 = vector.broadcast %3 : vector<1x128xf32> to vector<8x128xf32>
    %325 = arith.addf %283, %324 : vector<8x128xf32>
    %cst_40 = arith.constant dense<0.000000e+00> : vector<8x128xf32>
    %326 = tpu.matmul %323, %1, %cst_40 {dimension_numbers = #tpu.dot_dimension_numbers<[1], [0], [0], [1], [0, 0, 1, 1], [], []>} : vector<8x32xf32>, vector<32x128xf32>, vector<8x128xf32> -> vector<8x128xf32>
    %327 = arith.addf %325, %326 : vector<8x128xf32>
    %328 = arith.negf %327 : vector<8x128xf32>
    %329 = math.exp %328 : vector<8x128xf32>
    %cst_41 = arith.constant 1.000000e+00 : f32
    %330 = vector.broadcast %cst_41 : f32 to vector<8x128xf32>
    %331 = arith.addf %330, %329 : vector<8x128xf32>
    %332 = arith.divf %330, %331 : vector<8x128xf32>
    %333 = math.tanh %327 : vector<8x128xf32>
    %334 = arith.select %6, %332, %333 : vector<8x128xi1>, vector<8x128xf32>
    %335 = vector.extract_strided_slice %334 {offsets = [0, 0], sizes = [8, 32], strides = [1, 1]} : vector<8x128xf32> to vector<8x32xf32>
    %336 = vector.extract_strided_slice %334 {offsets = [0, 32], sizes = [8, 32], strides = [1, 1]} : vector<8x128xf32> to vector<8x32xf32>
    %337 = vector.extract_strided_slice %334 {offsets = [0, 64], sizes = [8, 32], strides = [1, 1]} : vector<8x128xf32> to vector<8x32xf32>
    %338 = vector.extract_strided_slice %334 {offsets = [0, 96], sizes = [8, 32], strides = [1, 1]} : vector<8x128xf32> to vector<8x32xf32>
    %339 = arith.mulf %336, %321 : vector<8x32xf32>
    %340 = arith.mulf %335, %338 : vector<8x32xf32>
    %341 = arith.addf %339, %340 : vector<8x32xf32>
    %342 = math.tanh %341 : vector<8x32xf32>
    %343 = arith.mulf %337, %342 : vector<8x32xf32>
    %c0_42 = arith.constant 0 : index
    %c0_43 = arith.constant 0 : index
    %344 = vector.load %arg7[%c0_42, %c0_43] : memref<32x16xf32, #tpu.memory_space<vmem>>, vector<32x16xf32>
    %cst_44 = arith.constant dense<0.000000e+00> : vector<8x16xf32>
    %345 = tpu.matmul %343, %344, %cst_44 {dimension_numbers = #tpu.dot_dimension_numbers<[1], [0], [0], [1], [0, 0, 1, 1], [], []>} : vector<8x32xf32>, vector<32x16xf32>, vector<8x16xf32> -> vector<8x16xf32>
    %c0_45 = arith.constant 0 : index
    %c0_46 = arith.constant 0 : index
    %346 = vector.load %arg8[%c0_45, %c0_46] : memref<1x16xf32, #tpu.memory_space<vmem>>, vector<1x16xf32>
    %347 = vector.broadcast %346 : vector<1x16xf32> to vector<8x16xf32>
    %348 = arith.addf %345, %347 : vector<8x16xf32>
    %c0_47 = arith.constant 0 : index
    %c0_48 = arith.constant 0 : index
    %349 = vector.load %arg9[%c0_47, %c0_48] : memref<8x16xf32, #tpu.memory_space<vmem>>, vector<8x16xf32>
    tpu.vector_store %arg9[%c0_47, %c0_48], %348 {strides = array<i32>} : memref<8x16xf32, #tpu.memory_space<vmem>>, vector<8x16xf32>,
    return
  }
  func.func @transform_0(%arg0: i32) -> (i32, i32) {
    %c0_i32 = arith.constant 0 : i32
    %c0_i32_0 = arith.constant 0 : i32
    %c0_i32_1 = arith.constant 0 : i32
    return %c0_i32, %c0_i32_0 : i32, i32
  }
  func.func @transform_1(%arg0: i32) -> (i32, i32) {
    %c0_i32 = arith.constant 0 : i32
    %c0_i32_0 = arith.constant 0 : i32
    %c0_i32_1 = arith.constant 0 : i32
    return %c0_i32, %c0_i32_0 : i32, i32
  }
  func.func @transform_2(%arg0: i32) -> (i32, i32) {
    %c0_i32 = arith.constant 0 : i32
    %c0_i32_0 = arith.constant 0 : i32
    %c0_i32_1 = arith.constant 0 : i32
    return %c0_i32, %c0_i32_0 : i32, i32
  }
  func.func @transform_3(%arg0: i32) -> (i32, i32) {
    %c0_i32 = arith.constant 0 : i32
    %c0_i32_0 = arith.constant 0 : i32
    %c0_i32_1 = arith.constant 0 : i32
    return %c0_i32, %c0_i32_0 : i32, i32
  }
  func.func @transform_4(%arg0: i32) -> (i32, i32) {
    %c0_i32 = arith.constant 0 : i32
    %c0_i32_0 = arith.constant 0 : i32
    %c0_i32_1 = arith.constant 0 : i32
    return %c0_i32, %c0_i32_0 : i32, i32
  }
  func.func @transform_5(%arg0: i32) -> (i32, i32) {
    %c0_i32 = arith.constant 0 : i32
    %c0_i32_0 = arith.constant 0 : i32
    %c0_i32_1 = arith.constant 0 : i32
    return %c0_i32, %c0_i32_0 : i32, i32
  }
  func.func @transform_6(%arg0: i32) -> (i32, i32) {
    %c0_i32 = arith.constant 0 : i32
    %c0_i32_0 = arith.constant 0 : i32
    %c0_i32_1 = arith.constant 0 : i32
    return %c0_i32, %c0_i32_0 : i32, i32
  }
  func.func @transform_7(%arg0: i32) -> (i32, i32) {
    %c0_i32 = arith.constant 0 : i32
    %c0_i32_0 = arith.constant 0 : i32
    %c0_i32_1 = arith.constant 0 : i32
    return %c0_i32, %c0_i32_0 : i32, i32
  }
  func.func @transform_8(%arg0: i32) -> (i32, i32) {
    %c0_i32 = arith.constant 0 : i32
    %c0_i32_0 = arith.constant 0 : i32
    %c0_i32_1 = arith.constant 0 : i32
    return %c0_i32, %c0_i32_0 : i32, i32
  }
}

</mosaic_0001>

<llo_original>
// kernel: tpu_custom_call.1
$region0: #{tpu_custom_call.1}
  #allocation0 [shape = 'u32[]', space=smem, size = 0x4, offset = 0x4, fixed_abs, tag = 'smem constant byte address 0x4 - core index']
  #allocation1 [shape = 'u32[144,128]{1,0:T(1,128)}', space=vmem, size = 0x12000, scoped, tag = 'internal scratch']
  %s0 = inlined_call_operand.vmem [shape: f32[64,16], index: 0, kind: input, shape index: {}]
  %s1 = inlined_call_operand.vmem [shape: f32[16,128], index: 1, kind: input, shape index: {}]
  %s2 = inlined_call_operand.vmem [shape: f32[32,256], index: 2, kind: input, shape index: {}]
  %s3 = inlined_call_operand.vmem [shape: f32[1,128], index: 3, kind: input, shape index: {}]
  %s4 = inlined_call_operand.vmem [shape: f32[32,128], index: 4, kind: input, shape index: {}]
  %s5 = inlined_call_operand.vmem [shape: f32[1,128], index: 5, kind: input, shape index: {}]
  %s6 = inlined_call_operand.vmem [shape: f32[32,16], index: 6, kind: input, shape index: {}]
  %s7 = inlined_call_operand.vmem [shape: f32[1,16], index: 7, kind: input, shape index: {}]
  %s8 = inlined_call_operand.hbm [shape: f32[8,16], index: 8, kind: output, shape index: {}]
  %s9 = sld [smem:[#allocation0]]
  $region42: #{tpu_custom_call.1} parent=0
    _
  %s11 = ssub.s32 1, %s9
  %s12 = scalar_select 0, %s11, %s9
  $region1: #{tpu_custom_call.1} parent=0
    #allocation2 [shape = 'u8[4096]{0}', space=vmem, size = 0x1000, scoped, tag = 'output window, operand 0, single buffered']
    #allocation3 [shape = 's32[1]{0}', space=sflag, size = 0x4, scoped, tag = 'scoped memory for tpu_custom_call.1']
    %13 = vsyncpa [#allocation3], 0
    // Predicated region
    $region2: #{tpu_custom_call.1} parent=1 // pred_check
      _
    $region3: #{tpu_custom_call.1} parent=1 // pred_check_branch
      %15 = sbr.rel (0) target = $region5
    $region4: #{tpu_custom_call.1} parent=1 // pred_region
      _
    $region5: #{tpu_custom_call.1} parent=1 // pred_fallthru
      _
    // Predicated region
    $region6: #{tpu_custom_call.1} parent=1 // pred_check
      _
    $region7: #{tpu_custom_call.1} parent=1 // pred_check_branch
      %17 = sbr.rel (0) target = $region9
    $region8: #{tpu_custom_call.1} parent=1 // pred_region
      _
    $region9: #{tpu_custom_call.1} parent=1 // pred_fallthru
      _
    // Predicated region
    $region10: #{tpu_custom_call.1} parent=1 // pred_check
      _
    $region11: #{tpu_custom_call.1} parent=1 // pred_check_branch
      %19 = sbr.rel (0) target = $region13
    $region12: #{tpu_custom_call.1} parent=1 // pred_region
      _
    $region13: #{tpu_custom_call.1} parent=1 // pred_fallthru
      _
    // Predicated region
    $region14: #{tpu_custom_call.1} parent=1 // pred_check
      _
    $region15: #{tpu_custom_call.1} parent=1 // pred_check_branch
      %21 = sbr.rel (0) target = $region17
    $region16: #{tpu_custom_call.1} parent=1 // pred_region
      _
    $region17: #{tpu_custom_call.1} parent=1 // pred_fallthru
      _
    // Predicated region
    $region18: #{tpu_custom_call.1} parent=1 // pred_check
      _
    $region19: #{tpu_custom_call.1} parent=1 // pred_check_branch
      %23 = sbr.rel (0) target = $region21
    $region20: #{tpu_custom_call.1} parent=1 // pred_region
      _
    $region21: #{tpu_custom_call.1} parent=1 // pred_fallthru
      _
    // Predicated region
    $region22: #{tpu_custom_call.1} parent=1 // pred_check
      _
    $region23: #{tpu_custom_call.1} parent=1 // pred_check_branch
      %25 = sbr.rel (0) target = $region25
    $region24: #{tpu_custom_call.1} parent=1 // pred_region
      _
    $region25: #{tpu_custom_call.1} parent=1 // pred_fallthru
      _
    // Predicated region
    $region26: #{tpu_custom_call.1} parent=1 // pred_check
      _
    $region27: #{tpu_custom_call.1} parent=1 // pred_check_branch
      %27 = sbr.rel (0) target = $region29
    $region28: #{tpu_custom_call.1} parent=1 // pred_region
      _
    $region29: #{tpu_custom_call.1} parent=1 // pred_fallthru
      _
    // Predicated region
    $region30: #{tpu_custom_call.1} parent=1 // pred_check
      _
    $region31: #{tpu_custom_call.1} parent=1 // pred_check_branch
      %29 = sbr.rel (0) target = $region33
    $region32: #{tpu_custom_call.1} parent=1 // pred_region
      _
    $region33: #{tpu_custom_call.1} parent=1 // pred_fallthru
      _
    %v30 = vld [vmem:[%s2] sm:$0xff]
    %v31 = vld [vmem:[%s2 + $0x8] sm:$0xff]
    %v32 = vld [vmem:[%s2 + $0x10] sm:$0xff]
    %v33 = vld [vmem:[%s2 + $0x18] sm:$0xff]
    %v34 = vld [vmem:[%s2 + $0x20] sm:$0xff]
    %v35 = vld [vmem:[%s2 + $0x28] sm:$0xff]
    %v36 = vld [vmem:[%s2 + $0x30] sm:$0xff]
    %v37 = vld [vmem:[%s2 + $0x38] sm:$0xff]
    %v38 = vld [vmem:[%s4] sm:$0xff]
    %v39 = vld [vmem:[%s4 + $0x8] sm:$0xff]
    %v40 = vld [vmem:[%s4 + $0x10] sm:$0xff]
    %v41 = vld [vmem:[%s4 + $0x18] sm:$0xff]
    %v42 = vld [vmem:[%s3] sm:$0x1]
    %v43 = vld [vmem:[%s5] sm:$0x1]
    %v44 = vlaneseq
    %v45 = vand.u32 %v44, 127
    %vm46 = vcmp.lt.s32.totalorder %v45, 96
    %v47 = vld [vmem:[%s0] sm:$0xff]
    %v48 = vld [vmem:[%s0 + $0x8] sm:$0xff]
    %v49 = vld [vmem:[%s0 + $0x10] sm:$0xff]
    %v50 = vld [vmem:[%s0 + $0x18] sm:$0xff]
    %v51 = vld [vmem:[%s0 + $0x20] sm:$0xff]
    %v52 = vld [vmem:[%s0 + $0x28] sm:$0xff]
    %v53 = vld [vmem:[%s0 + $0x30] sm:$0xff]
    %v54 = vld [vmem:[%s0 + $0x38] sm:$0xff]
    %v55 = vld [vmem:[%s1] sm:$0xff]
    %v56 = vld [vmem:[%s1 + $0x8] sm:$0xff]
    %vm57 = vcmask 130048
    %v59 = vsel %vm57, %v47, 0
    %v62 = vsel %vm57, %v48, 0
    %v65 = vsel %vm57, %v49, 0
    %v68 = vsel %vm57, %v50, 0
    %v71 = vsel %vm57, %v51, 0
    %v74 = vsel %vm57, %v52, 0
    %v77 = vsel %vm57, %v53, 0
    %v80 = vsel %vm57, %v54, 0
    %82 = vmatprep.subr.mxu0 0.0
    %83 = vmatpush1.msra.mxu0 %v55
    %84 = vmatprep.subr.mxu0 0.0
    %85 = vmatpush1.msra.mxu0 %v56
    %86 = vmatprep.subr.mxu0 0.0
    %87 = vmatpush1.msra.mxu0 0.0
    %88 = vmatprep.subr.mxu0 0.0
    %89 = vmatpush1.msra.mxu0 0.0
    %90 = vmatprep.subr.mxu0 0.0
    %91 = vmatpush1.msra.mxu0 0.0
    %92 = vmatprep.subr.mxu0 0.0
    %93 = vmatpush1.msra.mxu0 0.0
    %94 = vmatprep.subr.mxu0 0.0
    %95 = vmatpush1.msra.mxu0 0.0
    %96 = vmatprep.subr.mxu0 0.0
    %97 = vmatpush1.msra.mxu0 0.0
    %98 = vmatprep.subr.mxu0 0.0
    %99 = vmatpush1.msra.mxu0 0.0
    %100 = vmatprep.subr.mxu0 0.0
    %101 = vmatpush1.msra.mxu0 0.0
    %102 = vmatprep.subr.mxu0 0.0
    %103 = vmatpush1.msra.mxu0 0.0
    %104 = vmatprep.subr.mxu0 0.0
    %105 = vmatpush1.msra.mxu0 0.0
    %106 = vmatprep.subr.mxu0 0.0
    %107 = vmatpush1.msra.mxu0 0.0
    %108 = vmatprep.subr.mxu0 0.0
    %109 = vmatpush1.msra.mxu0 0.0
    %110 = vmatprep.subr.mxu0 0.0
    %111 = vmatpush1.msra.mxu0 0.0
    %112 = vmatprep.subr.mxu0 0.0
    %113 = vmatpush1.msra.mxu0 0.0
    %114 = vmatprep.subr.mxu0 0.0
    %115 = vmatpush1.msra.mxu0 0.0
    %116 = vmatprep.subr.mxu0 0.0
    %117 = vmatpush1.msra.mxu0 0.0
    %118 = vmatprep.subr.mxu0 0.0
    %119 = vmatpush1.msra.mxu0 0.0
    %120 = vmatprep.subr.mxu0 0.0
    %121 = vmatpush1.msra.mxu0 0.0
    %122 = vmatprep.subr.mxu0 0.0
    %123 = vmatpush1.msra.mxu0 0.0
    %124 = vmatprep.subr.mxu0 0.0
    %125 = vmatpush1.msra.mxu0 0.0
    %126 = vmatprep.subr.mxu0 0.0
    %127 = vmatpush1.msra.mxu0 0.0
    %128 = vmatprep.subr.mxu0 0.0
    %129 = vmatpush1.msra.mxu0 0.0
    %130 = vmatprep.subr.mxu0 0.0
    %131 = vmatpush1.msra.mxu0 0.0
    %132 = vmatprep.subr.mxu0 0.0
    %133 = vmatpush1.msra.mxu0 0.0
    %134 = vmatprep.subr.mxu0 0.0
    %135 = vmatpush1.msra.mxu0 0.0
    %136 = vmatprep.subr.mxu0 0.0
    %137 = vmatpush1.msra.mxu0 0.0
    %138 = vmatprep.subr.mxu0 0.0
    %139 = vmatpush1.msra.mxu0 0.0
    %140 = vmatprep.subr.mxu0 0.0
    %141 = vmatpush1.msra.mxu0 0.0
    %142 = vmatprep.subr.mxu0 0.0
    %143 = vmatpush1.msra.mxu0 0.0
    %144 = vmatprep.subr.mxu0 0.0
    %145 = vmatpush1.msra.mxu0 0.0
    %146 = vmatprep.mubr.f32.mxu0 0.0
    %147 = vmatmul.mubr.f32.gmra.mrb[0].mxu0 %v59
    %v148 = vpop.f32.mrb[0].mxu0
    %v149 = vadd.f32 0.0, %v148
    %v150 = vpop.f32.mrb[0].mxu0
    %151 = vmatprep.mubr.f32.mxu0 0.0
    %152 = vmatmul.mubr.f32.gmra.mrb[0].mxu0 %v62
    %v153 = vpop.f32.mrb[0].mxu0
    %v154 = vadd.f32 0.0, %v153
    %v155 = vpop.f32.mrb[0].mxu0
    %156 = vmatprep.mubr.f32.mxu0 0.0
    %157 = vmatmul.mubr.f32.gmra.mrb[0].mxu0 %v65
    %v158 = vpop.f32.mrb[0].mxu0
    %v159 = vadd.f32 0.0, %v158
    %v160 = vpop.f32.mrb[0].mxu0
    %161 = vmatprep.mubr.f32.mxu0 0.0
    %162 = vmatmul.mubr.f32.gmra.mrb[0].mxu0 %v68
    %v163 = vpop.f32.mrb[0].mxu0
    %v164 = vadd.f32 0.0, %v163
    %v165 = vpop.f32.mrb[0].mxu0
    %166 = vmatprep.mubr.f32.mxu0 0.0
    %167 = vmatmul.mubr.f32.gmra.mrb[0].mxu0 %v71
    %v168 = vpop.f32.mrb[0].mxu0
    %v169 = vadd.f32 0.0, %v168
    %v170 = vpop.f32.mrb[0].mxu0
    %171 = vmatprep.mubr.f32.mxu0 0.0
    %172 = vmatmul.mubr.f32.gmra.mrb[0].mxu0 %v74
    %v173 = vpop.f32.mrb[0].mxu0
    %v174 = vadd.f32 0.0, %v173
    %v175 = vpop.f32.mrb[0].mxu0
    %176 = vmatprep.mubr.f32.mxu0 0.0
    %177 = vmatmul.mubr.f32.gmra.mrb[0].mxu0 %v77
    %v178 = vpop.f32.mrb[0].mxu0
    %v179 = vadd.f32 0.0, %v178
    %v180 = vpop.f32.mrb[0].mxu0
    %181 = vmatprep.mubr.f32.mxu0 0.0
    %182 = vmatmul.mubr.f32.gmra.mrb[0].mxu0 %v80
    %v183 = vpop.f32.mrb[0].mxu0
    %v184 = vadd.f32 0.0, %v183
    %v185 = vpop.f32.mrb[0].mxu0
    %186 = vdwg.mxu0
    %v188 = vlaneseq
    %v189 = vshrl.u32 %v188, 7
    %v190 = vsub.s32 0, %v189
    %v191 = vrot.slane %v42, %v190
    %v193 = vadd.f32 %v149, %v191
    %v194 = vxor.u32 %v193, 2147483648
    %v195 = vmul.f32 %v194, 1.442695
    %v196 = vpow.pop %v195
    %v197 = vadd.f32 %v196, 1.0
    %v198 = vrcp.pop %v197
    %v199 = vmul.f32 1.0, %v198
    %v200 = vtanh.pop %v193
    %v201 = vsel %vm46, %v199, %v200
    %203 = vrot.lane.b32.xlu0 %v201, 32
    %v204 = vpop.permute.xlu0 %203
    %v206 = vmul.f32 %v201, %v204
    %v207 = vtanh.pop %v206
    %209 = vrot.lane.b32.xlu0 %v207, 64
    %v210 = vpop.permute.xlu0 %209
    %v212 = vmul.f32 %v201, %v210
    %v213 = vadd.f32 %v154, %v191
    %215 = vrot.lane.b32.xlu0 %v212, 64
    %v216 = vpop.permute.xlu0 %215
    %vm217 = vcmask 261120
    %v218 = vsel %vm217, %v216, 0
    %220 = vmatprep.subr.mxu0 %v31
    %221 = vmatpush1.msra.mxu0 %v30
    %222 = vmatprep.subr.mxu0 %v33
    %223 = vmatpush1.msra.mxu0 %v32
    %224 = vmatprep.subr.mxu0 %v35
    %225 = vmatpush1.msra.mxu0 %v34
    %226 = vmatprep.subr.mxu0 %v37
    %227 = vmatpush1.msra.mxu0 %v36
    %228 = vmatprep.subr.mxu0 0.0
    %229 = vmatpush1.msra.mxu0 0.0
    %230 = vmatprep.subr.mxu0 0.0
    %231 = vmatpush1.msra.mxu0 0.0
    %232 = vmatprep.subr.mxu0 0.0
    %233 = vmatpush1.msra.mxu0 0.0
    %234 = vmatprep.subr.mxu0 0.0
    %235 = vmatpush1.msra.mxu0 0.0
    %236 = vmatprep.subr.mxu0 0.0
    %237 = vmatpush1.msra.mxu0 0.0
    %238 = vmatprep.subr.mxu0 0.0
    %239 = vmatpush1.msra.mxu0 0.0
    %240 = vmatprep.subr.mxu0 0.0
    %241 = vmatpush1.msra.mxu0 0.0
    %242 = vmatprep.subr.mxu0 0.0
    %243 = vmatpush1.msra.mxu0 0.0
    %244 = vmatprep.subr.mxu0 0.0
    %245 = vmatpush1.msra.mxu0 0.0
    %246 = vmatprep.subr.mxu0 0.0
    %247 = vmatpush1.msra.mxu0 0.0
    %248 = vmatprep.subr.mxu0 0.0
    %249 = vmatpush1.msra.mxu0 0.0
    %250 = vmatprep.subr.mxu0 0.0
    %251 = vmatpush1.msra.mxu0 0.0
    %252 = vmatprep.subr.mxu0 0.0
    %253 = vmatpush1.msra.mxu0 0.0
    %254 = vmatprep.subr.mxu0 0.0
    %255 = vmatpush1.msra.mxu0 0.0
    %256 = vmatprep.subr.mxu0 0.0
    %257 = vmatpush1.msra.mxu0 0.0
    %258 = vmatprep.subr.mxu0 0.0
    %259 = vmatpush1.msra.mxu0 0.0
    %260 = vmatprep.subr.mxu0 0.0
    %261 = vmatpush1.msra.mxu0 0.0
    %262 = vmatprep.subr.mxu0 0.0
    %263 = vmatpush1.msra.mxu0 0.0
    %264 = vmatprep.subr.mxu0 0.0
    %265 = vmatpush1.msra.mxu0 0.0
    %266 = vmatprep.subr.mxu0 0.0
    %267 = vmatpush1.msra.mxu0 0.0
    %268 = vmatprep.subr.mxu0 0.0
    %269 = vmatpush1.msra.mxu0 0.0
    %270 = vmatprep.subr.mxu0 0.0
    %271 = vmatpush1.msra.mxu0 0.0
    %272 = vmatprep.subr.mxu0 0.0
    %273 = vmatpush1.msra.mxu0 0.0
    %274 = vmatprep.subr.mxu0 0.0
    %275 = vmatpush1.msra.mxu0 0.0
    %276 = vmatprep.subr.mxu0 0.0
    %277 = vmatpush1.msra.mxu0 0.0
    %278 = vmatprep.subr.mxu0 0.0
    %279 = vmatpush1.msra.mxu0 0.0
    %280 = vmatprep.subr.mxu0 0.0
    %281 = vmatpush1.msra.mxu0 0.0
    %282 = vmatprep.subr.mxu0 0.0
    %283 = vmatpush1.msra.mxu0 0.0
    %284 = vmatprep.mubr.f32.mxu0 0.0
    %285 = vmatmul.mubr.f32.gmra.mrb[0].mxu0 %v218
    %v286 = vpop.f32.mrb[0].mxu0
    %v287 = vadd.f32 0.0, %v286
    %v288 = vpop.f32.mrb[0].mxu0
    %v289 = vadd.f32 0.0, %v288
    %290 = vdwg.mxu0
    %v291 = vadd.f32 %v213, %v287
    %v292 = vxor.u32 %v291, 2147483648
    %v293 = vmul.f32 %v292, 1.442695
    %v294 = vpow.pop %v293
    %v295 = vadd.f32 %v294, 1.0
    %v296 = vrcp.pop %v295
    %v297 = vmul.f32 1.0, %v296
    %v298 = vtanh.pop %v291
    %v299 = vsel %vm46, %v297, %v298
    %301 = vrot.lane.b32.xlu0 %v206, 32
    %v302 = vpop.permute.xlu0 %301
    %v304 = vmul.f32 %v299, %v302
    %306 = vrot.lane.b32.xlu0 %v299, 32
    %v307 = vpop.permute.xlu0 %306
    %v309 = vmul.f32 %v299, %v307
    %311 = vrot.lane.b32.xlu0 %v309, 32
    %v312 = vpop.permute.xlu0 %311
    %v314 = vadd.f32 %v304, %v312
    %v315 = vtanh.pop %v314
    %317 = vrot.lane.b32.xlu0 %v315, 32
    %v318 = vpop.permute.xlu0 %317
    %v320 = vmul.f32 %v299, %v318
    %v321 = vadd.f32 %v159, %v191
    %323 = vrot.lane.b32.xlu0 %v320, 64
    %v324 = vpop.permute.xlu0 %323
    %v325 = vsel %vm217, %v324, 0
    %327 = vmatprep.subr.mxu0 %v31
    %328 = vmatpush1.msra.mxu0 %v30
    %329 = vmatprep.subr.mxu0 %v33
    %330 = vmatpush1.msra.mxu0 %v32
    %331 = vmatprep.subr.mxu0 %v35
    %332 = vmatpush1.msra.mxu0 %v34
    %333 = vmatprep.subr.mxu0 %v37
    %334 = vmatpush1.msra.mxu0 %v36
    %335 = vmatprep.subr.mxu0 0.0
    %336 = vmatpush1.msra.mxu0 0.0
    %337 = vmatprep.subr.mxu0 0.0
    %338 = vmatpush1.msra.mxu0 0.0
    %339 = vmatprep.subr.mxu0 0.0
    %340 = vmatpush1.msra.mxu0 0.0
    %341 = vmatprep.subr.mxu0 0.0
    %342 = vmatpush1.msra.mxu0 0.0
    %343 = vmatprep.subr.mxu0 0.0
    %344 = vmatpush1.msra.mxu0 0.0
    %345 = vmatprep.subr.mxu0 0.0
    %346 = vmatpush1.msra.mxu0 0.0
    %347 = vmatprep.subr.mxu0 0.0
    %348 = vmatpush1.msra.mxu0 0.0
    %349 = vmatprep.subr.mxu0 0.0
    %350 = vmatpush1.msra.mxu0 0.0
    %351 = vmatprep.subr.mxu0 0.0
    %352 = vmatpush1.msra.mxu0 0.0
    %353 = vmatprep.subr.mxu0 0.0
    %354 = vmatpush1.msra.mxu0 0.0
    %355 = vmatprep.subr.mxu0 0.0
    %356 = vmatpush1.msra.mxu0 0.0
    %357 = vmatprep.subr.mxu0 0.0
    %358 = vmatpush1.msra.mxu0 0.0
    %359 = vmatprep.subr.mxu0 0.0
    %360 = vmatpush1.msra.mxu0 0.0
    %361 = vmatprep.subr.mxu0 0.0
    %362 = vmatpush1.msra.mxu0 0.0
    %363 = vmatprep.subr.mxu0 0.0
    %364 = vmatpush1.msra.mxu0 0.0
    %365 = vmatprep.subr.mxu0 0.0
    %366 = vmatpush1.msra.mxu0 0.0
    %367 = vmatprep.subr.mxu0 0.0
    %368 = vmatpush1.msra.mxu0 0.0
    %369 = vmatprep.subr.mxu0 0.0
    %370 = vmatpush1.msra.mxu0 0.0
    %371 = vmatprep.subr.mxu0 0.0
    %372 = vmatpush1.msra.mxu0 0.0
    %373 = vmatprep.subr.mxu0 0.0
    %374 = vmatpush1.msra.mxu0 0.0
    %375 = vmatprep.subr.mxu0 0.0
    %376 = vmatpush1.msra.mxu0 0.0
    %377 = vmatprep.subr.mxu0 0.0
    %378 = vmatpush1.msra.mxu0 0.0
    %379 = vmatprep.subr.mxu0 0.0
    %380 = vmatpush1.msra.mxu0 0.0
    %381 = vmatprep.subr.mxu0 0.0
    %382 = vmatpush1.msra.mxu0 0.0
    %383 = vmatprep.subr.mxu0 0.0
    %384 = vmatpush1.msra.mxu0 0.0
    %385 = vmatprep.subr.mxu0 0.0
    %386 = vmatpush1.msra.mxu0 0.0
    %387 = vmatprep.subr.mxu0 0.0
    %388 = vmatpush1.msra.mxu0 0.0
    %389 = vmatprep.subr.mxu0 0.0
    %390 = vmatpush1.msra.mxu0 0.0
    %391 = vmatprep.mubr.f32.mxu0 0.0
    %392 = vmatmul.mubr.f32.gmra.mrb[0].mxu0 %v325
    %v393 = vpop.f32.mrb[0].mxu0
    %v394 = vadd.f32 0.0, %v393
    %v395 = vpop.f32.mrb[0].mxu0
    %v396 = vadd.f32 0.0, %v395
    %397 = vdwg.mxu0
    %v398 = vadd.f32 %v321, %v394
    %v399 = vxor.u32 %v398, 2147483648
    %v400 = vmul.f32 %v399, 1.442695
    %v401 = vpow.pop %v400
    %v402 = vadd.f32 %v401, 1.0
    %v403 = vrcp.pop %v402
    %v404 = vmul.f32 1.0, %v403
    %v405 = vtanh.pop %v398
    %v406 = vsel %vm46, %v404, %v405
    %v407 = vmul.f32 %v406, %v314
    %409 = vrot.lane.b32.xlu0 %v406, 32
    %v410 = vpop.permute.xlu0 %409
    %v412 = vmul.f32 %v406, %v410
    %414 = vrot.lane.b32.xlu0 %v412, 32
    %v415 = vpop.permute.xlu0 %414
    %v417 = vadd.f32 %v407, %v415
    %v418 = vtanh.pop %v417
    %420 = vrot.lane.b32.xlu0 %v418, 32
    %v421 = vpop.permute.xlu0 %420
    %v423 = vmul.f32 %v406, %v421
    %v425 = vlaneseq
    %v426 = vshrl.u32 %v425, 7
    %v427 = vsub.s32 0, %v426
    %v428 = vrot.slane %v43, %v427
    %v430 = vadd.f32 %v289, %v428
    %v431 = vxor.u32 %v430, 2147483648
    %v432 = vmul.f32 %v431, 1.442695
    %v433 = vpow.pop %v432
    %v434 = vadd.f32 %v433, 1.0
    %v435 = vrcp.pop %v434
    %v436 = vmul.f32 1.0, %v435
    %v437 = vtanh.pop %v430
    %v438 = vsel %vm46, %v436, %v437
    %440 = vrot.lane.b32.xlu0 %v438, 32
    %v441 = vpop.permute.xlu0 %440
    %v443 = vmul.f32 %v438, %v441
    %v444 = vtanh.pop %v443
    %446 = vrot.lane.b32.xlu0 %v444, 64
    %v447 = vpop.permute.xlu0 %446
    %v449 = vmul.f32 %v438, %v447
    %v450 = vadd.f32 %v164, %v191
    %452 = vrot.lane.b32.xlu0 %v423, 64
    %v453 = vpop.permute.xlu0 %452
    %v454 = vsel %vm217, %v453, 0
    %456 = vmatprep.subr.mxu0 %v31
    %457 = vmatpush1.msra.mxu0 %v30
    %458 = vmatprep.subr.mxu0 %v33
    %459 = vmatpush1.msra.mxu0 %v32
    %460 = vmatprep.subr.mxu0 %v35
    %461 = vmatpush1.msra.mxu0 %v34
    %462 = vmatprep.subr.mxu0 %v37
    %463 = vmatpush1.msra.mxu0 %v36
    %464 = vmatprep.subr.mxu0 0.0
    %465 = vmatpush1.msra.mxu0 0.0
    %466 = vmatprep.subr.mxu0 0.0
    %467 = vmatpush1.msra.mxu0 0.0
    %468 = vmatprep.subr.mxu0 0.0
    %469 = vmatpush1.msra.mxu0 0.0
    %470 = vmatprep.subr.mxu0 0.0
    %471 = vmatpush1.msra.mxu0 0.0
    %472 = vmatprep.subr.mxu0 0.0
    %473 = vmatpush1.msra.mxu0 0.0
    %474 = vmatprep.subr.mxu0 0.0
    %475 = vmatpush1.msra.mxu0 0.0
    %476 = vmatprep.subr.mxu0 0.0
    %477 = vmatpush1.msra.mxu0 0.0
    %478 = vmatprep.subr.mxu0 0.0
    %479 = vmatpush1.msra.mxu0 0.0
    %480 = vmatprep.subr.mxu0 0.0
    %481 = vmatpush1.msra.mxu0 0.0
    %482 = vmatprep.subr.mxu0 0.0
    %483 = vmatpush1.msra.mxu0 0.0
    %484 = vmatprep.subr.mxu0 0.0
    %485 = vmatpush1.msra.mxu0 0.0
    %486 = vmatprep.subr.mxu0 0.0
    %487 = vmatpush1.msra.mxu0 0.0
    %488 = vmatprep.subr.mxu0 0.0
    %489 = vmatpush1.msra.mxu0 0.0
    %490 = vmatprep.subr.mxu0 0.0
    %491 = vmatpush1.msra.mxu0 0.0
    %492 = vmatprep.subr.mxu0 0.0
    %493 = vmatpush1.msra.mxu0 0.0
    %494 = vmatprep.subr.mxu0 0.0
    %495 = vmatpush1.msra.mxu0 0.0
    %496 = vmatprep.subr.mxu0 0.0
    %497 = vmatpush1.msra.mxu0 0.0
    %498 = vmatprep.subr.mxu0 0.0
    %499 = vmatpush1.msra.mxu0 0.0
    %500 = vmatprep.subr.mxu0 0.0
    %501 = vmatpush1.msra.mxu0 0.0
    %502 = vmatprep.subr.mxu0 0.0
    %503 = vmatpush1.msra.mxu0 0.0
    %504 = vmatprep.subr.mxu0 0.0
    %505 = vmatpush1.msra.mxu0 0.0
    %506 = vmatprep.subr.mxu0 0.0
    %507 = vmatpush1.msra.mxu0 0.0
    %508 = vmatprep.subr.mxu0 0.0
    %509 = vmatpush1.msra.mxu0 0.0
    %510 = vmatprep.subr.mxu0 0.0
    %511 = vmatpush1.msra.mxu0 0.0
    %512 = vmatprep.subr.mxu0 0.0
    %513 = vmatpush1.msra.mxu0 0.0
    %514 = vmatprep.subr.mxu0 0.0
    %515 = vmatpush1.msra.mxu0 0.0
    %516 = vmatprep.subr.mxu0 0.0
    %517 = vmatpush1.msra.mxu0 0.0
    %518 = vmatprep.subr.mxu0 0.0
    %519 = vmatpush1.msra.mxu0 0.0
    %520 = vmatprep.mubr.f32.mxu0 0.0
    %521 = vmatmul.mubr.f32.gmra.mrb[0].mxu0 %v454
    %v522 = vpop.f32.mrb[0].mxu0
    %v523 = vadd.f32 0.0, %v522
    %v524 = vpop.f32.mrb[0].mxu0
    %v525 = vadd.f32 0.0, %v524
    %526 = vdwg.mxu0
    %v527 = vadd.f32 %v450, %v523
    %v528 = vxor.u32 %v527, 2147483648
    %v529 = vmul.f32 %v528, 1.442695
    %v530 = vpow.pop %v529
    %v531 = vadd.f32 %v530, 1.0
    %v532 = vrcp.pop %v531
    %v533 = vmul.f32 1.0, %v532
    %v534 = vtanh.pop %v527
    %v535 = vsel %vm46, %v533, %v534
    %v536 = vmul.f32 %v535, %v417
    %538 = vrot.lane.b32.xlu0 %v535, 32
    %v539 = vpop.permute.xlu0 %538
    %v541 = vmul.f32 %v535, %v539
    %543 = vrot.lane.b32.xlu0 %v541, 32
    %v544 = vpop.permute.xlu0 %543
    %v546 = vadd.f32 %v536, %v544
    %v547 = vtanh.pop %v546
    %549 = vrot.lane.b32.xlu0 %v547, 32
    %v550 = vpop.permute.xlu0 %549
    %v552 = vmul.f32 %v535, %v550
    %v553 = vadd.f32 %v396, %v428
    %555 = vrot.lane.b32.xlu0 %v449, 64
    %v556 = vpop.permute.xlu0 %555
    %v557 = vsel %vm217, %v556, 0
    %559 = vmatprep.subr.mxu0 0.0
    %560 = vmatpush1.msra.mxu0 %v38
    %561 = vmatprep.subr.mxu0 0.0
    %562 = vmatpush1.msra.mxu0 %v39
    %563 = vmatprep.subr.mxu0 0.0
    %564 = vmatpush1.msra.mxu0 %v40
    %565 = vmatprep.subr.mxu0 0.0
    %566 = vmatpush1.msra.mxu0 %v41
    %567 = vmatprep.subr.mxu0 0.0
    %568 = vmatpush1.msra.mxu0 0.0
    %569 = vmatprep.subr.mxu0 0.0
    %570 = vmatpush1.msra.mxu0 0.0
    %571 = vmatprep.subr.mxu0 0.0
    %572 = vmatpush1.msra.mxu0 0.0
    %573 = vmatprep.subr.mxu0 0.0
    %574 = vmatpush1.msra.mxu0 0.0
    %575 = vmatprep.subr.mxu0 0.0
    %576 = vmatpush1.msra.mxu0 0.0
    %577 = vmatprep.subr.mxu0 0.0
    %578 = vmatpush1.msra.mxu0 0.0
    %579 = vmatprep.subr.mxu0 0.0
    %580 = vmatpush1.msra.mxu0 0.0
    %581 = vmatprep.subr.mxu0 0.0
    %582 = vmatpush1.msra.mxu0 0.0
    %583 = vmatprep.subr.mxu0 0.0
    %584 = vmatpush1.msra.mxu0 0.0
    %585 = vmatprep.subr.mxu0 0.0
    %586 = vmatpush1.msra.mxu0 0.0
    %587 = vmatprep.subr.mxu0 0.0
    %588 = vmatpush1.msra.mxu0 0.0
    %589 = vmatprep.subr.mxu0 0.0
    %590 = vmatpush1.msra.mxu0 0.0
    %591 = vmatprep.subr.mxu0 0.0
    %592 = vmatpush1.msra.mxu0 0.0
    %593 = vmatprep.subr.mxu0 0.0
    %594 = vmatpush1.msra.mxu0 0.0
    %595 = vmatprep.subr.mxu0 0.0
    %596 = vmatpush1.msra.mxu0 0.0
    %597 = vmatprep.subr.mxu0 0.0
    %598 = vmatpush1.msra.mxu0 0.0
    %599 = vmatprep.subr.mxu0 0.0
    %600 = vmatpush1.msra.mxu0 0.0
    %601 = vmatprep.subr.mxu0 0.0
    %602 = vmatpush1.msra.mxu0 0.0
    %603 = vmatprep.subr.mxu0 0.0
    %604 = vmatpush1.msra.mxu0 0.0
    %605 = vmatprep.subr.mxu0 0.0
    %606 = vmatpush1.msra.mxu0 0.0
    %607 = vmatprep.subr.mxu0 0.0
    %608 = vmatpush1.msra.mxu0 0.0
    %609 = vmatprep.subr.mxu0 0.0
    %610 = vmatpush1.msra.mxu0 0.0
    %611 = vmatprep.subr.mxu0 0.0
    %612 = vmatpush1.msra.mxu0 0.0
    %613 = vmatprep.subr.mxu0 0.0
    %614 = vmatpush1.msra.mxu0 0.0
    %615 = vmatprep.subr.mxu0 0.0
    %616 = vmatpush1.msra.mxu0 0.0
    %617 = vmatprep.subr.mxu0 0.0
    %618 = vmatpush1.msra.mxu0 0.0
    %619 = vmatprep.subr.mxu0 0.0
    %620 = vmatpush1.msra.mxu0 0.0
    %621 = vmatprep.subr.mxu0 0.0
    %622 = vmatpush1.msra.mxu0 0.0
    %623 = vmatprep.mubr.f32.mxu0 0.0
    %624 = vmatmul.mubr.f32.gmra.mrb[0].mxu0 %v557
    %v625 = vpop.f32.mrb[0].mxu0
    %v626 = vadd.f32 0.0, %v625
    %v627 = vpop.f32.mrb[0].mxu0
    %628 = vdwg.mxu0
    %v629 = vadd.f32 %v553, %v626
    %v630 = vxor.u32 %v629, 2147483648
    %v631 = vmul.f32 %v630, 1.442695
    %v632 = vpow.pop %v631
    %v633 = vadd.f32 %v632, 1.0
    %v634 = vrcp.pop %v633
    %v635 = vmul.f32 1.0, %v634
    %v636 = vtanh.pop %v629
    %v637 = vsel %vm46, %v635, %v636
    %639 = vrot.lane.b32.xlu0 %v443, 32
    %v640 = vpop.permute.xlu0 %639
    %v642 = vmul.f32 %v637, %v640
    %644 = vrot.lane.b32.xlu0 %v637, 32
    %v645 = vpop.permute.xlu0 %644
    %v647 = vmul.f32 %v637, %v645
    %649 = vrot.lane.b32.xlu0 %v647, 32
    %v650 = vpop.permute.xlu0 %649
    %v652 = vadd.f32 %v642, %v650
    %v653 = vtanh.pop %v652
    %655 = vrot.lane.b32.xlu0 %v653, 32
    %v656 = vpop.permute.xlu0 %655
    %v658 = vmul.f32 %v637, %v656
    %v659 = vadd.f32 %v169, %v191
    %661 = vrot.lane.b32.xlu0 %v552, 64
    %v662 = vpop.permute.xlu0 %661
    %v663 = vsel %vm217, %v662, 0
    %665 = vmatprep.subr.mxu0 %v31
    %666 = vmatpush1.msra.mxu0 %v30
    %667 = vmatprep.subr.mxu0 %v33
    %668 = vmatpush1.msra.mxu0 %v32
    %669 = vmatprep.subr.mxu0 %v35
    %670 = vmatpush1.msra.mxu0 %v34
    %671 = vmatprep.subr.mxu0 %v37
    %672 = vmatpush1.msra.mxu0 %v36
    %673 = vmatprep.subr.mxu0 0.0
    %674 = vmatpush1.msra.mxu0 0.0
    %675 = vmatprep.subr.mxu0 0.0
    %676 = vmatpush1.msra.mxu0 0.0
    %677 = vmatprep.subr.mxu0 0.0
    %678 = vmatpush1.msra.mxu0 0.0
    %679 = vmatprep.subr.mxu0 0.0
    %680 = vmatpush1.msra.mxu0 0.0
    %681 = vmatprep.subr.mxu0 0.0
    %682 = vmatpush1.msra.mxu0 0.0
    %683 = vmatprep.subr.mxu0 0.0
    %684 = vmatpush1.msra.mxu0 0.0
    %685 = vmatprep.subr.mxu0 0.0
    %686 = vmatpush1.msra.mxu0 0.0
    %687 = vmatprep.subr.mxu0 0.0
    %688 = vmatpush1.msra.mxu0 0.0
    %689 = vmatprep.subr.mxu0 0.0
    %690 = vmatpush1.msra.mxu0 0.0
    %691 = vmatprep.subr.mxu0 0.0
    %692 = vmatpush1.msra.mxu0 0.0
    %693 = vmatprep.subr.mxu0 0.0
    %694 = vmatpush1.msra.mxu0 0.0
    %695 = vmatprep.subr.mxu0 0.0
    %696 = vmatpush1.msra.mxu0 0.0
    %697 = vmatprep.subr.mxu0 0.0
    %698 = vmatpush1.msra.mxu0 0.0
    %699 = vmatprep.subr.mxu0 0.0
    %700 = vmatpush1.msra.mxu0 0.0
    %701 = vmatprep.subr.mxu0 0.0
    %702 = vmatpush1.msra.mxu0 0.0
    %703 = vmatprep.subr.mxu0 0.0
    %704 = vmatpush1.msra.mxu0 0.0
    %705 = vmatprep.subr.mxu0 0.0
    %706 = vmatpush1.msra.mxu0 0.0
    %707 = vmatprep.subr.mxu0 0.0
    %708 = vmatpush1.msra.mxu0 0.0
    %709 = vmatprep.subr.mxu0 0.0
    %710 = vmatpush1.msra.mxu0 0.0
    %711 = vmatprep.subr.mxu0 0.0
    %712 = vmatpush1.msra.mxu0 0.0
    %713 = vmatprep.subr.mxu0 0.0
    %714 = vmatpush1.msra.mxu0 0.0
    %715 = vmatprep.subr.mxu0 0.0
    %716 = vmatpush1.msra.mxu0 0.0
    %717 = vmatprep.subr.mxu0 0.0
    %718 = vmatpush1.msra.mxu0 0.0
    %719 = vmatprep.subr.mxu0 0.0
    %720 = vmatpush1.msra.mxu0 0.0
    %721 = vmatprep.subr.mxu0 0.0
    %722 = vmatpush1.msra.mxu0 0.0
    %723 = vmatprep.subr.mxu0 0.0
    %724 = vmatpush1.msra.mxu0 0.0
    %725 = vmatprep.subr.mxu0 0.0
    %726 = vmatpush1.msra.mxu0 0.0
    %727 = vmatprep.subr.mxu0 0.0
    %728 = vmatpush1.msra.mxu0 0.0
    %729 = vmatprep.mubr.f32.mxu0 0.0
    %730 = vmatmul.mubr.f32.gmra.mrb[0].mxu0 %v663
    %v731 = vpop.f32.mrb[0].mxu0
    %v732 = vadd.f32 0.0, %v731
    %v733 = vpop.f32.mrb[0].mxu0
    %v734 = vadd.f32 0.0, %v733
    %735 = vdwg.mxu0
    %v736 = vadd.f32 %v659, %v732
    %v737 = vxor.u32 %v736, 2147483648
    %v738 = vmul.f32 %v737, 1.442695
    %v739 = vpow.pop %v738
    %v740 = vadd.f32 %v739, 1.0
    %v741 = vrcp.pop %v740
    %v742 = vmul.f32 1.0, %v741
    %v743 = vtanh.pop %v736
    %v744 = vsel %vm46, %v742, %v743
    %v745 = vmul.f32 %v744, %v546
    %747 = vrot.lane.b32.xlu0 %v744, 32
    %v748 = vpop.permute.xlu0 %747
    %v750 = vmul.f32 %v744, %v748
    %752 = vrot.lane.b32.xlu0 %v750, 32
    %v753 = vpop.permute.xlu0 %752
    %v755 = vadd.f32 %v745, %v753
    %v756 = vtanh.pop %v755
    %758 = vrot.lane.b32.xlu0 %v756, 32
    %v759 = vpop.permute.xlu0 %758
    %v761 = vmul.f32 %v744, %v759
    %v762 = vadd.f32 %v525, %v428
    %764 = vrot.lane.b32.xlu0 %v658, 64
    %v765 = vpop.permute.xlu0 %764
    %v766 = vsel %vm217, %v765, 0
    %768 = vmatprep.subr.mxu0 0.0
    %769 = vmatpush1.msra.mxu0 %v38
    %770 = vmatprep.subr.mxu0 0.0
    %771 = vmatpush1.msra.mxu0 %v39
    %772 = vmatprep.subr.mxu0 0.0
    %773 = vmatpush1.msra.mxu0 %v40
    %774 = vmatprep.subr.mxu0 0.0
    %775 = vmatpush1.msra.mxu0 %v41
    %776 = vmatprep.subr.mxu0 0.0
    %777 = vmatpush1.msra.mxu0 0.0
    %778 = vmatprep.subr.mxu0 0.0
    %779 = vmatpush1.msra.mxu0 0.0
    %780 = vmatprep.subr.mxu0 0.0
    %781 = vmatpush1.msra.mxu0 0.0
    %782 = vmatprep.subr.mxu0 0.0
    %783 = vmatpush1.msra.mxu0 0.0
    %784 = vmatprep.subr.mxu0 0.0
    %785 = vmatpush1.msra.mxu0 0.0
    %786 = vmatprep.subr.mxu0 0.0
    %787 = vmatpush1.msra.mxu0 0.0
    %788 = vmatprep.subr.mxu0 0.0
    %789 = vmatpush1.msra.mxu0 0.0
    %790 = vmatprep.subr.mxu0 0.0
    %791 = vmatpush1.msra.mxu0 0.0
    %792 = vmatprep.subr.mxu0 0.0
    %793 = vmatpush1.msra.mxu0 0.0
    %794 = vmatprep.subr.mxu0 0.0
    %795 = vmatpush1.msra.mxu0 0.0
    %796 = vmatprep.subr.mxu0 0.0
    %797 = vmatpush1.msra.mxu0 0.0
    %798 = vmatprep.subr.mxu0 0.0
    %799 = vmatpush1.msra.mxu0 0.0
    %800 = vmatprep.subr.mxu0 0.0
    %801 = vmatpush1.msra.mxu0 0.0
    %802 = vmatprep.subr.mxu0 0.0
    %803 = vmatpush1.msra.mxu0 0.0
    %804 = vmatprep.subr.mxu0 0.0
    %805 = vmatpush1.msra.mxu0 0.0
    %806 = vmatprep.subr.mxu0 0.0
    %807 = vmatpush1.msra.mxu0 0.0
    %808 = vmatprep.subr.mxu0 0.0
    %809 = vmatpush1.msra.mxu0 0.0
    %810 = vmatprep.subr.mxu0 0.0
    %811 = vmatpush1.msra.mxu0 0.0
    %812 = vmatprep.subr.mxu0 0.0
    %813 = vmatpush1.msra.mxu0 0.0
    %814 = vmatprep.subr.mxu0 0.0
    %815 = vmatpush1.msra.mxu0 0.0
    %816 = vmatprep.subr.mxu0 0.0
    %817 = vmatpush1.msra.mxu0 0.0
    %818 = vmatprep.subr.mxu0 0.0
    %819 = vmatpush1.msra.mxu0 0.0
    %820 = vmatprep.subr.mxu0 0.0
    %821 = vmatpush1.msra.mxu0 0.0
    %822 = vmatprep.subr.mxu0 0.0
    %823 = vmatpush1.msra.mxu0 0.0
    %824 = vmatprep.subr.mxu0 0.0
    %825 = vmatpush1.msra.mxu0 0.0
    %826 = vmatprep.subr.mxu0 0.0
    %827 = vmatpush1.msra.mxu0 0.0
    %828 = vmatprep.subr.mxu0 0.0
    %829 = vmatpush1.msra.mxu0 0.0
    %830 = vmatprep.subr.mxu0 0.0
    %831 = vmatpush1.msra.mxu0 0.0
    %832 = vmatprep.mubr.f32.mxu0 0.0
    %833 = vmatmul.mubr.f32.gmra.mrb[0].mxu0 %v766
    %v834 = vpop.f32.mrb[0].mxu0
    %v835 = vadd.f32 0.0, %v834
    %v836 = vpop.f32.mrb[0].mxu0
    %837 = vdwg.mxu0
    %v838 = vadd.f32 %v762, %v835
    %v839 = vxor.u32 %v838, 2147483648
    %v840 = vmul.f32 %v839, 1.442695
    %v841 = vpow.pop %v840
    %v842 = vadd.f32 %v841, 1.0
    %v843 = vrcp.pop %v842
    %v844 = vmul.f32 1.0, %v843
    %v845 = vtanh.pop %v838
    %v846 = vsel %vm46, %v844, %v845
    %v847 = vmul.f32 %v846, %v652
    %849 = vrot.lane.b32.xlu0 %v846, 32
    %v850 = vpop.permute.xlu0 %849
    %v852 = vmul.f32 %v846, %v850
    %854 = vrot.lane.b32.xlu0 %v852, 32
    %v855 = vpop.permute.xlu0 %854
    %v857 = vadd.f32 %v847, %v855
    %v858 = vtanh.pop %v857
    %860 = vrot.lane.b32.xlu0 %v858, 32
    %v861 = vpop.permute.xlu0 %860
    %v863 = vmul.f32 %v846, %v861
    %v864 = vadd.f32 %v174, %v191
    %866 = vrot.lane.b32.xlu0 %v761, 64
    %v867 = vpop.permute.xlu0 %866
    %v868 = vsel %vm217, %v867, 0
    %870 = vmatprep.subr.mxu0 %v31
    %871 = vmatpush1.msra.mxu0 %v30
    %872 = vmatprep.subr.mxu0 %v33
    %873 = vmatpush1.msra.mxu0 %v32
    %874 = vmatprep.subr.mxu0 %v35
    %875 = vmatpush1.msra.mxu0 %v34
    %876 = vmatprep.subr.mxu0 %v37
    %877 = vmatpush1.msra.mxu0 %v36
    %878 = vmatprep.subr.mxu0 0.0
    %879 = vmatpush1.msra.mxu0 0.0
    %880 = vmatprep.subr.mxu0 0.0
    %881 = vmatpush1.msra.mxu0 0.0
    %882 = vmatprep.subr.mxu0 0.0
    %883 = vmatpush1.msra.mxu0 0.0
    %884 = vmatprep.subr.mxu0 0.0
    %885 = vmatpush1.msra.mxu0 0.0
    %886 = vmatprep.subr.mxu0 0.0
    %887 = vmatpush1.msra.mxu0 0.0
    %888 = vmatprep.subr.mxu0 0.0
    %889 = vmatpush1.msra.mxu0 0.0
    %890 = vmatprep.subr.mxu0 0.0
    %891 = vmatpush1.msra.mxu0 0.0
    %892 = vmatprep.subr.mxu0 0.0
    %893 = vmatpush1.msra.mxu0 0.0
    %894 = vmatprep.subr.mxu0 0.0
    %895 = vmatpush1.msra.mxu0 0.0
    %896 = vmatprep.subr.mxu0 0.0
    %897 = vmatpush1.msra.mxu0 0.0
    %898 = vmatprep.subr.mxu0 0.0
    %899 = vmatpush1.msra.mxu0 0.0
    %900 = vmatprep.subr.mxu0 0.0
    %901 = vmatpush1.msra.mxu0 0.0
    %902 = vmatprep.subr.mxu0 0.0
    %903 = vmatpush1.msra.mxu0 0.0
    %904 = vmatprep.subr.mxu0 0.0
    %905 = vmatpush1.msra.mxu0 0.0
    %906 = vmatprep.subr.mxu0 0.0
    %907 = vmatpush1.msra.mxu0 0.0
    %908 = vmatprep.subr.mxu0 0.0
    %909 = vmatpush1.msra.mxu0 0.0
    %910 = vmatprep.subr.mxu0 0.0
    %911 = vmatpush1.msra.mxu0 0.0
    %912 = vmatprep.subr.mxu0 0.0
    %913 = vmatpush1.msra.mxu0 0.0
    %914 = vmatprep.subr.mxu0 0.0
    %915 = vmatpush1.msra.mxu0 0.0
    %916 = vmatprep.subr.mxu0 0.0
    %917 = vmatpush1.msra.mxu0 0.0
    %918 = vmatprep.subr.mxu0 0.0
    %919 = vmatpush1.msra.mxu0 0.0
    %920 = vmatprep.subr.mxu0 0.0
    %921 = vmatpush1.msra.mxu0 0.0
    %922 = vmatprep.subr.mxu0 0.0
    %923 = vmatpush1.msra.mxu0 0.0
    %924 = vmatprep.subr.mxu0 0.0
    %925 = vmatpush1.msra.mxu0 0.0
    %926 = vmatprep.subr.mxu0 0.0
    %927 = vmatpush1.msra.mxu0 0.0
    %928 = vmatprep.subr.mxu0 0.0
    %929 = vmatpush1.msra.mxu0 0.0
    %930 = vmatprep.subr.mxu0 0.0
    %931 = vmatpush1.msra.mxu0 0.0
    %932 = vmatprep.subr.mxu0 0.0
    %933 = vmatpush1.msra.mxu0 0.0
    %934 = vmatprep.mubr.f32.mxu0 0.0
    %935 = vmatmul.mubr.f32.gmra.mrb[0].mxu0 %v868
    %v936 = vpop.f32.mrb[0].mxu0
    %v937 = vadd.f32 0.0, %v936
    %v938 = vpop.f32.mrb[0].mxu0
    %v939 = vadd.f32 0.0, %v938
    %940 = vdwg.mxu0
    %v941 = vadd.f32 %v864, %v937
    %v942 = vxor.u32 %v941, 2147483648
    %v943 = vmul.f32 %v942, 1.442695
    %v944 = vpow.pop %v943
    %v945 = vadd.f32 %v944, 1.0
    %v946 = vrcp.pop %v945
    %v947 = vmul.f32 1.0, %v946
    %v948 = vtanh.pop %v941
    %v949 = vsel %vm46, %v947, %v948
    %v950 = vmul.f32 %v949, %v755
    %952 = vrot.lane.b32.xlu0 %v949, 32
    %v953 = vpop.permute.xlu0 %952
    %v955 = vmul.f32 %v949, %v953
    %957 = vrot.lane.b32.xlu0 %v955, 32
    %v958 = vpop.permute.xlu0 %957
    %v960 = vadd.f32 %v950, %v958
    %v961 = vtanh.pop %v960
    %963 = vrot.lane.b32.xlu0 %v961, 32
    %v964 = vpop.permute.xlu0 %963
    %v966 = vmul.f32 %v949, %v964
    %v967 = vadd.f32 %v734, %v428
    %969 = vrot.lane.b32.xlu0 %v863, 64
    %v970 = vpop.permute.xlu0 %969
    %v971 = vsel %vm217, %v970, 0
    %973 = vmatprep.subr.mxu0 0.0
    %974 = vmatpush1.msra.mxu0 %v38
    %975 = vmatprep.subr.mxu0 0.0
    %976 = vmatpush1.msra.mxu0 %v39
    %977 = vmatprep.subr.mxu0 0.0
    %978 = vmatpush1.msra.mxu0 %v40
    %979 = vmatprep.subr.mxu0 0.0
    %980 = vmatpush1.msra.mxu0 %v41
    %981 = vmatprep.subr.mxu0 0.0
    %982 = vmatpush1.msra.mxu0 0.0
    %983 = vmatprep.subr.mxu0 0.0
    %984 = vmatpush1.msra.mxu0 0.0
    %985 = vmatprep.subr.mxu0 0.0
    %986 = vmatpush1.msra.mxu0 0.0
    %987 = vmatprep.subr.mxu0 0.0
    %988 = vmatpush1.msra.mxu0 0.0
    %989 = vmatprep.subr.mxu0 0.0
    %990 = vmatpush1.msra.mxu0 0.0
    %991 = vmatprep.subr.mxu0 0.0
    %992 = vmatpush1.msra.mxu0 0.0
    %993 = vmatprep.subr.mxu0 0.0
    %994 = vmatpush1.msra.mxu0 0.0
    %995 = vmatprep.subr.mxu0 0.0
    %996 = vmatpush1.msra.mxu0 0.0
    %997 = vmatprep.subr.mxu0 0.0
    %998 = vmatpush1.msra.mxu0 0.0
    %999 = vmatprep.subr.mxu0 0.0
    %1000 = vmatpush1.msra.mxu0 0.0
    %1001 = vmatprep.subr.mxu0 0.0
    %1002 = vmatpush1.msra.mxu0 0.0
    %1003 = vmatprep.subr.mxu0 0.0
    %1004 = vmatpush1.msra.mxu0 0.0
    %1005 = vmatprep.subr.mxu0 0.0
    %1006 = vmatpush1.msra.mxu0 0.0
    %1007 = vmatprep.subr.mxu0 0.0
    %1008 = vmatpush1.msra.mxu0 0.0
    %1009 = vmatprep.subr.mxu0 0.0
    %1010 = vmatpush1.msra.mxu0 0.0
    %1011 = vmatprep.subr.mxu0 0.0
    %1012 = vmatpush1.msra.mxu0 0.0
    %1013 = vmatprep.subr.mxu0 0.0
    %1014 = vmatpush1.msra.mxu0 0.0
    %1015 = vmatprep.subr.mxu0 0.0
    %1016 = vmatpush1.msra.mxu0 0.0
    %1017 = vmatprep.subr.mxu0 0.0
    %1018 = vmatpush1.msra.mxu0 0.0
    %1019 = vmatprep.subr.mxu0 0.0
    %1020 = vmatpush1.msra.mxu0 0.0
    %1021 = vmatprep.subr.mxu0 0.0
    %1022 = vmatpush1.msra.mxu0 0.0
    %1023 = vmatprep.subr.mxu0 0.0
    %1024 = vmatpush1.msra.mxu0 0.0
    %1025 = vmatprep.subr.mxu0 0.0
    %1026 = vmatpush1.msra.mxu0 0.0
    %1027 = vmatprep.subr.mxu0 0.0
    %1028 = vmatpush1.msra.mxu0 0.0
    %1029 = vmatprep.subr.mxu0 0.0
    %1030 = vmatpush1.msra.mxu0 0.0
    %1031 = vmatprep.subr.mxu0 0.0
    %1032 = vmatpush1.msra.mxu0 0.0
    %1033 = vmatprep.subr.mxu0 0.0
    %1034 = vmatpush1.msra.mxu0 0.0
    %1035 = vmatprep.subr.mxu0 0.0
    %1036 = vmatpush1.msra.mxu0 0.0
    %1037 = vmatprep.mubr.f32.mxu0 0.0
    %1038 = vmatmul.mubr.f32.gmra.mrb[0].mxu0 %v971
    %v1039 = vpop.f32.mrb[0].mxu0
    %v1040 = vadd.f32 0.0, %v1039
    %v1041 = vpop.f32.mrb[0].mxu0
    %1042 = vdwg.mxu0
    %v1043 = vadd.f32 %v967, %v1040
    %v1044 = vxor.u32 %v1043, 2147483648
    %v1045 = vmul.f32 %v1044, 1.442695
    %v1046 = vpow.pop %v1045
    %v1047 = vadd.f32 %v1046, 1.0
    %v1048 = vrcp.pop %v1047
    %v1049 = vmul.f32 1.0, %v1048
    %v1050 = vtanh.pop %v1043
    %v1051 = vsel %vm46, %v1049, %v1050
    %v1052 = vmul.f32 %v1051, %v857
    %1054 = vrot.lane.b32.xlu0 %v1051, 32
    %v1055 = vpop.permute.xlu0 %1054
    %v1057 = vmul.f32 %v1051, %v1055
    %1059 = vrot.lane.b32.xlu0 %v1057, 32
    %v1060 = vpop.permute.xlu0 %1059
    %v1062 = vadd.f32 %v1052, %v1060
    %v1063 = vtanh.pop %v1062
    %1065 = vrot.lane.b32.xlu0 %v1063, 32
    %v1066 = vpop.permute.xlu0 %1065
    %v1068 = vmul.f32 %v1051, %v1066
    %v1069 = vadd.f32 %v179, %v191
    %1071 = vrot.lane.b32.xlu0 %v966, 64
    %v1072 = vpop.permute.xlu0 %1071
    %v1073 = vsel %vm217, %v1072, 0
    %1075 = vmatprep.subr.mxu0 %v31
    %1076 = vmatpush1.msra.mxu0 %v30
    %1077 = vmatprep.subr.mxu0 %v33
    %1078 = vmatpush1.msra.mxu0 %v32
    %1079 = vmatprep.subr.mxu0 %v35
    %1080 = vmatpush1.msra.mxu0 %v34
    %1081 = vmatprep.subr.mxu0 %v37
    %1082 = vmatpush1.msra.mxu0 %v36
    %1083 = vmatprep.subr.mxu0 0.0
    %1084 = vmatpush1.msra.mxu0 0.0
    %1085 = vmatprep.subr.mxu0 0.0
    %1086 = vmatpush1.msra.mxu0 0.0
    %1087 = vmatprep.subr.mxu0 0.0
    %1088 = vmatpush1.msra.mxu0 0.0
    %1089 = vmatprep.subr.mxu0 0.0
    %1090 = vmatpush1.msra.mxu0 0.0
    %1091 = vmatprep.subr.mxu0 0.0
    %1092 = vmatpush1.msra.mxu0 0.0
    %1093 = vmatprep.subr.mxu0 0.0
    %1094 = vmatpush1.msra.mxu0 0.0
    %1095 = vmatprep.subr.mxu0 0.0
    %1096 = vmatpush1.msra.mxu0 0.0
    %1097 = vmatprep.subr.mxu0 0.0
    %1098 = vmatpush1.msra.mxu0 0.0
    %1099 = vmatprep.subr.mxu0 0.0
    %1100 = vmatpush1.msra.mxu0 0.0
    %1101 = vmatprep.subr.mxu0 0.0
    %1102 = vmatpush1.msra.mxu0 0.0
    %1103 = vmatprep.subr.mxu0 0.0
    %1104 = vmatpush1.msra.mxu0 0.0
    %1105 = vmatprep.subr.mxu0 0.0
    %1106 = vmatpush1.msra.mxu0 0.0
    %1107 = vmatprep.subr.mxu0 0.0
    %1108 = vmatpush1.msra.mxu0 0.0
    %1109 = vmatprep.subr.mxu0 0.0
    %1110 = vmatpush1.msra.mxu0 0.0
    %1111 = vmatprep.subr.mxu0 0.0
    %1112 = vmatpush1.msra.mxu0 0.0
    %1113 = vmatprep.subr.mxu0 0.0
    %1114 = vmatpush1.msra.mxu0 0.0
    %1115 = vmatprep.subr.mxu0 0.0
    %1116 = vmatpush1.msra.mxu0 0.0
    %1117 = vmatprep.subr.mxu0 0.0
    %1118 = vmatpush1.msra.mxu0 0.0
    %1119 = vmatprep.subr.mxu0 0.0
    %1120 = vmatpush1.msra.mxu0 0.0
    %1121 = vmatprep.subr.mxu0 0.0
    %1122 = vmatpush1.msra.mxu0 0.0
    %1123 = vmatprep.subr.mxu0 0.0
    %1124 = vmatpush1.msra.mxu0 0.0
    %1125 = vmatprep.subr.mxu0 0.0
    %1126 = vmatpush1.msra.mxu0 0.0
    %1127 = vmatprep.subr.mxu0 0.0
    %1128 = vmatpush1.msra.mxu0 0.0
    %1129 = vmatprep.subr.mxu0 0.0
    %1130 = vmatpush1.msra.mxu0 0.0
    %1131 = vmatprep.subr.mxu0 0.0
    %1132 = vmatpush1.msra.mxu0 0.0
    %1133 = vmatprep.subr.mxu0 0.0
    %1134 = vmatpush1.msra.mxu0 0.0
    %1135 = vmatprep.subr.mxu0 0.0
    %1136 = vmatpush1.msra.mxu0 0.0
    %1137 = vmatprep.subr.mxu0 0.0
    %1138 = vmatpush1.msra.mxu0 0.0
    %1139 = vmatprep.mubr.f32.mxu0 0.0
    %1140 = vmatmul.mubr.f32.gmra.mrb[0].mxu0 %v1073
    %v1141 = vpop.f32.mrb[0].mxu0
    %v1142 = vadd.f32 0.0, %v1141
    %v1143 = vpop.f32.mrb[0].mxu0
    %v1144 = vadd.f32 0.0, %v1143
    %1145 = vdwg.mxu0
    %v1146 = vadd.f32 %v1069, %v1142
    %v1147 = vxor.u32 %v1146, 2147483648
    %v1148 = vmul.f32 %v1147, 1.442695
    %v1149 = vpow.pop %v1148
    %v1150 = vadd.f32 %v1149, 1.0
    %v1151 = vrcp.pop %v1150
    %v1152 = vmul.f32 1.0, %v1151
    %v1153 = vtanh.pop %v1146
    %v1154 = vsel %vm46, %v1152, %v1153
    %v1155 = vmul.f32 %v1154, %v960
    %1157 = vrot.lane.b32.xlu0 %v1154, 32
    %v1158 = vpop.permute.xlu0 %1157
    %v1160 = vmul.f32 %v1154, %v1158
    %1162 = vrot.lane.b32.xlu0 %v1160, 32
    %v1163 = vpop.permute.xlu0 %1162
    %v1165 = vadd.f32 %v1155, %v1163
    %v1166 = vtanh.pop %v1165
    %1168 = vrot.lane.b32.xlu0 %v1166, 32
    %v1169 = vpop.permute.xlu0 %1168
    %v1171 = vmul.f32 %v1154, %v1169
    %v1172 = vadd.f32 %v939, %v428
    %1174 = vrot.lane.b32.xlu0 %v1068, 64
    %v1175 = vpop.permute.xlu0 %1174
    %v1176 = vsel %vm217, %v1175, 0
    %1178 = vmatprep.subr.mxu0 0.0
    %1179 = vmatpush1.msra.mxu0 %v38
    %1180 = vmatprep.subr.mxu0 0.0
    %1181 = vmatpush1.msra.mxu0 %v39
    %1182 = vmatprep.subr.mxu0 0.0
    %1183 = vmatpush1.msra.mxu0 %v40
    %1184 = vmatprep.subr.mxu0 0.0
    %1185 = vmatpush1.msra.mxu0 %v41
    %1186 = vmatprep.subr.mxu0 0.0
    %1187 = vmatpush1.msra.mxu0 0.0
    %1188 = vmatprep.subr.mxu0 0.0
    %1189 = vmatpush1.msra.mxu0 0.0
    %1190 = vmatprep.subr.mxu0 0.0
    %1191 = vmatpush1.msra.mxu0 0.0
    %1192 = vmatprep.subr.mxu0 0.0
    %1193 = vmatpush1.msra.mxu0 0.0
    %1194 = vmatprep.subr.mxu0 0.0
    %1195 = vmatpush1.msra.mxu0 0.0
    %1196 = vmatprep.subr.mxu0 0.0
    %1197 = vmatpush1.msra.mxu0 0.0
    %1198 = vmatprep.subr.mxu0 0.0
    %1199 = vmatpush1.msra.mxu0 0.0
    %1200 = vmatprep.subr.mxu0 0.0
    %1201 = vmatpush1.msra.mxu0 0.0
    %1202 = vmatprep.subr.mxu0 0.0
    %1203 = vmatpush1.msra.mxu0 0.0
    %1204 = vmatprep.subr.mxu0 0.0
    %1205 = vmatpush1.msra.mxu0 0.0
    %1206 = vmatprep.subr.mxu0 0.0
    %1207 = vmatpush1.msra.mxu0 0.0
    %1208 = vmatprep.subr.mxu0 0.0
    %1209 = vmatpush1.msra.mxu0 0.0
    %1210 = vmatprep.subr.mxu0 0.0
    %1211 = vmatpush1.msra.mxu0 0.0
    %1212 = vmatprep.subr.mxu0 0.0
    %1213 = vmatpush1.msra.mxu0 0.0
    %1214 = vmatprep.subr.mxu0 0.0
    %1215 = vmatpush1.msra.mxu0 0.0
    %1216 = vmatprep.subr.mxu0 0.0
    %1217 = vmatpush1.msra.mxu0 0.0
    %1218 = vmatprep.subr.mxu0 0.0
    %1219 = vmatpush1.msra.mxu0 0.0
    %1220 = vmatprep.subr.mxu0 0.0
    %1221 = vmatpush1.msra.mxu0 0.0
    %1222 = vmatprep.subr.mxu0 0.0
    %1223 = vmatpush1.msra.mxu0 0.0
    %1224 = vmatprep.subr.mxu0 0.0
    %1225 = vmatpush1.msra.mxu0 0.0
    %1226 = vmatprep.subr.mxu0 0.0
    %1227 = vmatpush1.msra.mxu0 0.0
    %1228 = vmatprep.subr.mxu0 0.0
    %1229 = vmatpush1.msra.mxu0 0.0
    %1230 = vmatprep.subr.mxu0 0.0
    %1231 = vmatpush1.msra.mxu0 0.0
    %1232 = vmatprep.subr.mxu0 0.0
    %1233 = vmatpush1.msra.mxu0 0.0
    %1234 = vmatprep.subr.mxu0 0.0
    %1235 = vmatpush1.msra.mxu0 0.0
    %1236 = vmatprep.subr.mxu0 0.0
    %1237 = vmatpush1.msra.mxu0 0.0
    %1238 = vmatprep.subr.mxu0 0.0
    %1239 = vmatpush1.msra.mxu0 0.0
    %1240 = vmatprep.subr.mxu0 0.0
    %1241 = vmatpush1.msra.mxu0 0.0
    %1242 = vmatprep.mubr.f32.mxu0 0.0
    %1243 = vmatmul.mubr.f32.gmra.mrb[0].mxu0 %v1176
    %v1244 = vpop.f32.mrb[0].mxu0
    %v1245 = vadd.f32 0.0, %v1244
    %v1246 = vpop.f32.mrb[0].mxu0
    %1247 = vdwg.mxu0
    %v1248 = vadd.f32 %v1172, %v1245
    %v1249 = vxor.u32 %v1248, 2147483648
    %v1250 = vmul.f32 %v1249, 1.442695
    %v1251 = vpow.pop %v1250
    %v1252 = vadd.f32 %v1251, 1.0
    %v1253 = vrcp.pop %v1252
    %v1254 = vmul.f32 1.0, %v1253
    %v1255 = vtanh.pop %v1248
    %v1256 = vsel %vm46, %v1254, %v1255
    %v1257 = vmul.f32 %v1256, %v1062
    %1259 = vrot.lane.b32.xlu0 %v1256, 32
    %v1260 = vpop.permute.xlu0 %1259
    %v1262 = vmul.f32 %v1256, %v1260
    %1264 = vrot.lane.b32.xlu0 %v1262, 32
    %v1265 = vpop.permute.xlu0 %1264
    %v1267 = vadd.f32 %v1257, %v1265
    %v1268 = vtanh.pop %v1267
    %1270 = vrot.lane.b32.xlu0 %v1268, 32
    %v1271 = vpop.permute.xlu0 %1270
    %v1273 = vmul.f32 %v1256, %v1271
    %v1274 = vadd.f32 %v184, %v191
    %1276 = vrot.lane.b32.xlu0 %v1171, 64
    %v1277 = vpop.permute.xlu0 %1276
    %v1278 = vsel %vm217, %v1277, 0
    %1280 = vmatprep.subr.mxu0 %v31
    %1281 = vmatpush1.msra.mxu0 %v30
    %1282 = vmatprep.subr.mxu0 %v33
    %1283 = vmatpush1.msra.mxu0 %v32
    %1284 = vmatprep.subr.mxu0 %v35
    %1285 = vmatpush1.msra.mxu0 %v34
    %1286 = vmatprep.subr.mxu0 %v37
    %1287 = vmatpush1.msra.mxu0 %v36
    %1288 = vmatprep.subr.mxu0 0.0
    %1289 = vmatpush1.msra.mxu0 0.0
    %1290 = vmatprep.subr.mxu0 0.0
    %1291 = vmatpush1.msra.mxu0 0.0
    %1292 = vmatprep.subr.mxu0 0.0
    %1293 = vmatpush1.msra.mxu0 0.0
    %1294 = vmatprep.subr.mxu0 0.0
    %1295 = vmatpush1.msra.mxu0 0.0
    %1296 = vmatprep.subr.mxu0 0.0
    %1297 = vmatpush1.msra.mxu0 0.0
    %1298 = vmatprep.subr.mxu0 0.0
    %1299 = vmatpush1.msra.mxu0 0.0
    %1300 = vmatprep.subr.mxu0 0.0
    %1301 = vmatpush1.msra.mxu0 0.0
    %1302 = vmatprep.subr.mxu0 0.0
    %1303 = vmatpush1.msra.mxu0 0.0
    %1304 = vmatprep.subr.mxu0 0.0
    %1305 = vmatpush1.msra.mxu0 0.0
    %1306 = vmatprep.subr.mxu0 0.0
    %1307 = vmatpush1.msra.mxu0 0.0
    %1308 = vmatprep.subr.mxu0 0.0
    %1309 = vmatpush1.msra.mxu0 0.0
    %1310 = vmatprep.subr.mxu0 0.0
    %1311 = vmatpush1.msra.mxu0 0.0
    %1312 = vmatprep.subr.mxu0 0.0
    %1313 = vmatpush1.msra.mxu0 0.0
    %1314 = vmatprep.subr.mxu0 0.0
    %1315 = vmatpush1.msra.mxu0 0.0
    %1316 = vmatprep.subr.mxu0 0.0
    %1317 = vmatpush1.msra.mxu0 0.0
    %1318 = vmatprep.subr.mxu0 0.0
    %1319 = vmatpush1.msra.mxu0 0.0
    %1320 = vmatprep.subr.mxu0 0.0
    %1321 = vmatpush1.msra.mxu0 0.0
    %1322 = vmatprep.subr.mxu0 0.0
    %1323 = vmatpush1.msra.mxu0 0.0
    %1324 = vmatprep.subr.mxu0 0.0
    %1325 = vmatpush1.msra.mxu0 0.0
    %1326 = vmatprep.subr.mxu0 0.0
    %1327 = vmatpush1.msra.mxu0 0.0
    %1328 = vmatprep.subr.mxu0 0.0
    %1329 = vmatpush1.msra.mxu0 0.0
    %1330 = vmatprep.subr.mxu0 0.0
    %1331 = vmatpush1.msra.mxu0 0.0
    %1332 = vmatprep.subr.mxu0 0.0
    %1333 = vmatpush1.msra.mxu0 0.0
    %1334 = vmatprep.subr.mxu0 0.0
    %1335 = vmatpush1.msra.mxu0 0.0
    %1336 = vmatprep.subr.mxu0 0.0
    %1337 = vmatpush1.msra.mxu0 0.0
    %1338 = vmatprep.subr.mxu0 0.0
    %1339 = vmatpush1.msra.mxu0 0.0
    %1340 = vmatprep.subr.mxu0 0.0
    %1341 = vmatpush1.msra.mxu0 0.0
    %1342 = vmatprep.subr.mxu0 0.0
    %1343 = vmatpush1.msra.mxu0 0.0
    %1344 = vmatprep.mubr.f32.mxu0 0.0
    %1345 = vmatmul.mubr.f32.gmra.mrb[0].mxu0 %v1278
    %v1346 = vpop.f32.mrb[0].mxu0
    %v1347 = vadd.f32 0.0, %v1346
    %v1348 = vpop.f32.mrb[0].mxu0
    %v1349 = vadd.f32 0.0, %v1348
    %1350 = vdwg.mxu0
    %v1351 = vadd.f32 %v1274, %v1347
    %v1352 = vxor.u32 %v1351, 2147483648
    %v1353 = vmul.f32 %v1352, 1.442695
    %v1354 = vpow.pop %v1353
    %v1355 = vadd.f32 %v1354, 1.0
    %v1356 = vrcp.pop %v1355
    %v1357 = vmul.f32 1.0, %v1356
    %v1358 = vtanh.pop %v1351
    %v1359 = vsel %vm46, %v1357, %v1358
    %v1360 = vmul.f32 %v1359, %v1165
    %1362 = vrot.lane.b32.xlu0 %v1359, 32
    %v1363 = vpop.permute.xlu0 %1362
    %v1365 = vmul.f32 %v1359, %v1363
    %1367 = vrot.lane.b32.xlu0 %v1365, 32
    %v1368 = vpop.permute.xlu0 %1367
    %v1370 = vadd.f32 %v1360, %v1368
    %v1371 = vtanh.pop %v1370
    %1373 = vrot.lane.b32.xlu0 %v1371, 32
    %v1374 = vpop.permute.xlu0 %1373
    %v1376 = vmul.f32 %v1359, %v1374
    %v1377 = vadd.f32 %v1144, %v428
    %1379 = vrot.lane.b32.xlu0 %v1273, 64
    %v1380 = vpop.permute.xlu0 %1379
    %v1381 = vsel %vm217, %v1380, 0
    %1383 = vmatprep.subr.mxu0 0.0
    %1384 = vmatpush1.msra.mxu0 %v38
    %1385 = vmatprep.subr.mxu0 0.0
    %1386 = vmatpush1.msra.mxu0 %v39
    %1387 = vmatprep.subr.mxu0 0.0
    %1388 = vmatpush1.msra.mxu0 %v40
    %1389 = vmatprep.subr.mxu0 0.0
    %1390 = vmatpush1.msra.mxu0 %v41
    %1391 = vmatprep.subr.mxu0 0.0
    %1392 = vmatpush1.msra.mxu0 0.0
    %1393 = vmatprep.subr.mxu0 0.0
    %1394 = vmatpush1.msra.mxu0 0.0
    %1395 = vmatprep.subr.mxu0 0.0
    %1396 = vmatpush1.msra.mxu0 0.0
    %1397 = vmatprep.subr.mxu0 0.0
    %1398 = vmatpush1.msra.mxu0 0.0
    %1399 = vmatprep.subr.mxu0 0.0
    %1400 = vmatpush1.msra.mxu0 0.0
    %1401 = vmatprep.subr.mxu0 0.0
    %1402 = vmatpush1.msra.mxu0 0.0
    %1403 = vmatprep.subr.mxu0 0.0
    %1404 = vmatpush1.msra.mxu0 0.0
    %1405 = vmatprep.subr.mxu0 0.0
    %1406 = vmatpush1.msra.mxu0 0.0
    %1407 = vmatprep.subr.mxu0 0.0
    %1408 = vmatpush1.msra.mxu0 0.0
    %1409 = vmatprep.subr.mxu0 0.0
    %1410 = vmatpush1.msra.mxu0 0.0
    %1411 = vmatprep.subr.mxu0 0.0
    %1412 = vmatpush1.msra.mxu0 0.0
    %1413 = vmatprep.subr.mxu0 0.0
    %1414 = vmatpush1.msra.mxu0 0.0
    %1415 = vmatprep.subr.mxu0 0.0
    %1416 = vmatpush1.msra.mxu0 0.0
    %1417 = vmatprep.subr.mxu0 0.0
    %1418 = vmatpush1.msra.mxu0 0.0
    %1419 = vmatprep.subr.mxu0 0.0
    %1420 = vmatpush1.msra.mxu0 0.0
    %1421 = vmatprep.subr.mxu0 0.0
    %1422 = vmatpush1.msra.mxu0 0.0
    %1423 = vmatprep.subr.mxu0 0.0
    %1424 = vmatpush1.msra.mxu0 0.0
    %1425 = vmatprep.subr.mxu0 0.0
    %1426 = vmatpush1.msra.mxu0 0.0
    %1427 = vmatprep.subr.mxu0 0.0
    %1428 = vmatpush1.msra.mxu0 0.0
    %1429 = vmatprep.subr.mxu0 0.0
    %1430 = vmatpush1.msra.mxu0 0.0
    %1431 = vmatprep.subr.mxu0 0.0
    %1432 = vmatpush1.msra.mxu0 0.0
    %1433 = vmatprep.subr.mxu0 0.0
    %1434 = vmatpush1.msra.mxu0 0.0
    %1435 = vmatprep.subr.mxu0 0.0
    %1436 = vmatpush1.msra.mxu0 0.0
    %1437 = vmatprep.subr.mxu0 0.0
    %1438 = vmatpush1.msra.mxu0 0.0
    %1439 = vmatprep.subr.mxu0 0.0
    %1440 = vmatpush1.msra.mxu0 0.0
    %1441 = vmatprep.subr.mxu0 0.0
    %1442 = vmatpush1.msra.mxu0 0.0
    %1443 = vmatprep.subr.mxu0 0.0
    %1444 = vmatpush1.msra.mxu0 0.0
    %1445 = vmatprep.subr.mxu0 0.0
    %1446 = vmatpush1.msra.mxu0 0.0
    %1447 = vmatprep.mubr.f32.mxu0 0.0
    %1448 = vmatmul.mubr.f32.gmra.mrb[0].mxu0 %v1381
    %v1449 = vpop.f32.mrb[0].mxu0
    %v1450 = vadd.f32 0.0, %v1449
    %v1451 = vpop.f32.mrb[0].mxu0
    %1452 = vdwg.mxu0
    %v1453 = vadd.f32 %v1377, %v1450
    %v1454 = vxor.u32 %v1453, 2147483648
    %v1455 = vmul.f32 %v1454, 1.442695
    %v1456 = vpow.pop %v1455
    %v1457 = vadd.f32 %v1456, 1.0
    %v1458 = vrcp.pop %v1457
    %v1459 = vmul.f32 1.0, %v1458
    %v1460 = vtanh.pop %v1453
    %v1461 = vsel %vm46, %v1459, %v1460
    %v1462 = vmul.f32 %v1461, %v1267
    %1464 = vrot.lane.b32.xlu0 %v1461, 32
    %v1465 = vpop.permute.xlu0 %1464
    %v1467 = vmul.f32 %v1461, %v1465
    %1469 = vrot.lane.b32.xlu0 %v1467, 32
    %v1470 = vpop.permute.xlu0 %1469
    %v1472 = vadd.f32 %v1462, %v1470
    %v1473 = vtanh.pop %v1472
    %1475 = vrot.lane.b32.xlu0 %v1473, 32
    %v1476 = vpop.permute.xlu0 %1475
    %v1478 = vmul.f32 %v1461, %v1476
    %v1479 = vadd.f32 %v1349, %v428
    %1481 = vrot.lane.b32.xlu0 %v1478, 64
    %v1482 = vpop.permute.xlu0 %1481
    %v1483 = vsel %vm217, %v1482, 0
    %1485 = vmatprep.subr.mxu0 0.0
    %1486 = vmatpush1.msra.mxu0 %v38
    %1487 = vmatprep.subr.mxu0 0.0
    %1488 = vmatpush1.msra.mxu0 %v39
    %1489 = vmatprep.subr.mxu0 0.0
    %1490 = vmatpush1.msra.mxu0 %v40
    %1491 = vmatprep.subr.mxu0 0.0
    %1492 = vmatpush1.msra.mxu0 %v41
    %1493 = vmatprep.subr.mxu0 0.0
    %1494 = vmatpush1.msra.mxu0 0.0
    %1495 = vmatprep.subr.mxu0 0.0
    %1496 = vmatpush1.msra.mxu0 0.0
    %1497 = vmatprep.subr.mxu0 0.0
    %1498 = vmatpush1.msra.mxu0 0.0
    %1499 = vmatprep.subr.mxu0 0.0
    %1500 = vmatpush1.msra.mxu0 0.0
    %1501 = vmatprep.subr.mxu0 0.0
    %1502 = vmatpush1.msra.mxu0 0.0
    %1503 = vmatprep.subr.mxu0 0.0
    %1504 = vmatpush1.msra.mxu0 0.0
    %1505 = vmatprep.subr.mxu0 0.0
    %1506 = vmatpush1.msra.mxu0 0.0
    %1507 = vmatprep.subr.mxu0 0.0
    %1508 = vmatpush1.msra.mxu0 0.0
    %1509 = vmatprep.subr.mxu0 0.0
    %1510 = vmatpush1.msra.mxu0 0.0
    %1511 = vmatprep.subr.mxu0 0.0
    %1512 = vmatpush1.msra.mxu0 0.0
    %1513 = vmatprep.subr.mxu0 0.0
    %1514 = vmatpush1.msra.mxu0 0.0
    %1515 = vmatprep.subr.mxu0 0.0
    %1516 = vmatpush1.msra.mxu0 0.0
    %1517 = vmatprep.subr.mxu0 0.0
    %1518 = vmatpush1.msra.mxu0 0.0
    %1519 = vmatprep.subr.mxu0 0.0
    %1520 = vmatpush1.msra.mxu0 0.0
    %1521 = vmatprep.subr.mxu0 0.0
    %1522 = vmatpush1.msra.mxu0 0.0
    %1523 = vmatprep.subr.mxu0 0.0
    %1524 = vmatpush1.msra.mxu0 0.0
    %1525 = vmatprep.subr.mxu0 0.0
    %1526 = vmatpush1.msra.mxu0 0.0
    %1527 = vmatprep.subr.mxu0 0.0
    %1528 = vmatpush1.msra.mxu0 0.0
    %1529 = vmatprep.subr.mxu0 0.0
    %1530 = vmatpush1.msra.mxu0 0.0
    %1531 = vmatprep.subr.mxu0 0.0
    %1532 = vmatpush1.msra.mxu0 0.0
    %1533 = vmatprep.subr.mxu0 0.0
    %1534 = vmatpush1.msra.mxu0 0.0
    %1535 = vmatprep.subr.mxu0 0.0
    %1536 = vmatpush1.msra.mxu0 0.0
    %1537 = vmatprep.subr.mxu0 0.0
    %1538 = vmatpush1.msra.mxu0 0.0
    %1539 = vmatprep.subr.mxu0 0.0
    %1540 = vmatpush1.msra.mxu0 0.0
    %1541 = vmatprep.subr.mxu0 0.0
    %1542 = vmatpush1.msra.mxu0 0.0
    %1543 = vmatprep.subr.mxu0 0.0
    %1544 = vmatpush1.msra.mxu0 0.0
    %1545 = vmatprep.subr.mxu0 0.0
    %1546 = vmatpush1.msra.mxu0 0.0
    %1547 = vmatprep.subr.mxu0 0.0
    %1548 = vmatpush1.msra.mxu0 0.0
    %1549 = vmatprep.mubr.f32.mxu0 0.0
    %1550 = vmatmul.mubr.f32.gmra.mrb[0].mxu0 %v1483
    %v1551 = vpop.f32.mrb[0].mxu0
    %v1552 = vadd.f32 0.0, %v1551
    %v1553 = vpop.f32.mrb[0].mxu0
    %1554 = vdwg.mxu0
    %v1555 = vadd.f32 %v1479, %v1552
    %v1556 = vxor.u32 %v1555, 2147483648
    %v1557 = vmul.f32 %v1556, 1.442695
    %v1558 = vpow.pop %v1557
    %v1559 = vadd.f32 %v1558, 1.0
    %v1560 = vrcp.pop %v1559
    %v1561 = vmul.f32 1.0, %v1560
    %v1562 = vtanh.pop %v1555
    %v1563 = vsel %vm46, %v1561, %v1562
    %v1564 = vmul.f32 %v1563, %v1472
    %1566 = vrot.lane.b32.xlu0 %v1563, 32
    %v1567 = vpop.permute.xlu0 %1566
    %v1569 = vmul.f32 %v1563, %v1567
    %1571 = vrot.lane.b32.xlu0 %v1569, 32
    %v1572 = vpop.permute.xlu0 %1571
    %v1574 = vadd.f32 %v1564, %v1572
    %v1575 = vtanh.pop %v1574
    %1577 = vrot.lane.b32.xlu0 %v1575, 32
    %v1578 = vpop.permute.xlu0 %1577
    %v1580 = vmul.f32 %v1563, %v1578
    %1582 = vrot.lane.b32.xlu0 %v1376, 64
    %v1583 = vpop.permute.xlu0 %1582
    %v1584 = vsel %vm217, %v1583, 0
    %1586 = vmatprep.subr.mxu0 0.0
    %1587 = vmatpush1.msra.mxu0 %v31
    %1588 = vmatprep.subr.mxu0 0.0
    %1589 = vmatpush1.msra.mxu0 %v33
    %1590 = vmatprep.subr.mxu0 0.0
    %1591 = vmatpush1.msra.mxu0 %v35
    %1592 = vmatprep.subr.mxu0 0.0
    %1593 = vmatpush1.msra.mxu0 %v37
    %1594 = vmatprep.subr.mxu0 0.0
    %1595 = vmatpush1.msra.mxu0 0.0
    %1596 = vmatprep.subr.mxu0 0.0
    %1597 = vmatpush1.msra.mxu0 0.0
    %1598 = vmatprep.subr.mxu0 0.0
    %1599 = vmatpush1.msra.mxu0 0.0
    %1600 = vmatprep.subr.mxu0 0.0
    %1601 = vmatpush1.msra.mxu0 0.0
    %1602 = vmatprep.subr.mxu0 0.0
    %1603 = vmatpush1.msra.mxu0 0.0
    %1604 = vmatprep.subr.mxu0 0.0
    %1605 = vmatpush1.msra.mxu0 0.0
    %1606 = vmatprep.subr.mxu0 0.0
    %1607 = vmatpush1.msra.mxu0 0.0
    %1608 = vmatprep.subr.mxu0 0.0
    %1609 = vmatpush1.msra.mxu0 0.0
    %1610 = vmatprep.subr.mxu0 0.0
    %1611 = vmatpush1.msra.mxu0 0.0
    %1612 = vmatprep.subr.mxu0 0.0
    %1613 = vmatpush1.msra.mxu0 0.0
    %1614 = vmatprep.subr.mxu0 0.0
    %1615 = vmatpush1.msra.mxu0 0.0
    %1616 = vmatprep.subr.mxu0 0.0
    %1617 = vmatpush1.msra.mxu0 0.0
    %1618 = vmatprep.subr.mxu0 0.0
    %1619 = vmatpush1.msra.mxu0 0.0
    %1620 = vmatprep.subr.mxu0 0.0
    %1621 = vmatpush1.msra.mxu0 0.0
    %1622 = vmatprep.subr.mxu0 0.0
    %1623 = vmatpush1.msra.mxu0 0.0
    %1624 = vmatprep.subr.mxu0 0.0
    %1625 = vmatpush1.msra.mxu0 0.0
    %1626 = vmatprep.subr.mxu0 0.0
    %1627 = vmatpush1.msra.mxu0 0.0
    %1628 = vmatprep.subr.mxu0 0.0
    %1629 = vmatpush1.msra.mxu0 0.0
    %1630 = vmatprep.subr.mxu0 0.0
    %1631 = vmatpush1.msra.mxu0 0.0
    %1632 = vmatprep.subr.mxu0 0.0
    %1633 = vmatpush1.msra.mxu0 0.0
    %1634 = vmatprep.subr.mxu0 0.0
    %1635 = vmatpush1.msra.mxu0 0.0
    %1636 = vmatprep.subr.mxu0 0.0
    %1637 = vmatpush1.msra.mxu0 0.0
    %1638 = vmatprep.subr.mxu0 0.0
    %1639 = vmatpush1.msra.mxu0 0.0
    %1640 = vmatprep.subr.mxu0 0.0
    %1641 = vmatpush1.msra.mxu0 0.0
    %1642 = vmatprep.subr.mxu0 0.0
    %1643 = vmatpush1.msra.mxu0 0.0
    %1644 = vmatprep.subr.mxu0 0.0
    %1645 = vmatpush1.msra.mxu0 0.0
    %1646 = vmatprep.subr.mxu0 0.0
    %1647 = vmatpush1.msra.mxu0 0.0
    %1648 = vmatprep.subr.mxu0 0.0
    %1649 = vmatpush1.msra.mxu0 0.0
    %1650 = vmatprep.mubr.f32.mxu0 0.0
    %1651 = vmatmul.mubr.f32.gmra.mrb[0].mxu0 %v1584
    %v1652 = vpop.f32.mrb[0].mxu0
    %v1653 = vadd.f32 %v428, %v1652
    %v1654 = vpop.f32.mrb[0].mxu0
    %1655 = vdwg.mxu0
    %1657 = vrot.lane.b32.xlu0 %v1580, 64
    %v1658 = vpop.permute.xlu0 %1657
    %v1659 = vsel %vm217, %v1658, 0
    %1661 = vmatprep.subr.mxu0 0.0
    %1662 = vmatpush1.msra.mxu0 %v38
    %1663 = vmatprep.subr.mxu0 0.0
    %1664 = vmatpush1.msra.mxu0 %v39
    %1665 = vmatprep.subr.mxu0 0.0
    %1666 = vmatpush1.msra.mxu0 %v40
    %1667 = vmatprep.subr.mxu0 0.0
    %1668 = vmatpush1.msra.mxu0 %v41
    %1669 = vmatprep.subr.mxu0 0.0
    %1670 = vmatpush1.msra.mxu0 0.0
    %1671 = vmatprep.subr.mxu0 0.0
    %1672 = vmatpush1.msra.mxu0 0.0
    %1673 = vmatprep.subr.mxu0 0.0
    %1674 = vmatpush1.msra.mxu0 0.0
    %1675 = vmatprep.subr.mxu0 0.0
    %1676 = vmatpush1.msra.mxu0 0.0
    %1677 = vmatprep.subr.mxu0 0.0
    %1678 = vmatpush1.msra.mxu0 0.0
    %1679 = vmatprep.subr.mxu0 0.0
    %1680 = vmatpush1.msra.mxu0 0.0
    %1681 = vmatprep.subr.mxu0 0.0
    %1682 = vmatpush1.msra.mxu0 0.0
    %1683 = vmatprep.subr.mxu0 0.0
    %1684 = vmatpush1.msra.mxu0 0.0
    %1685 = vmatprep.subr.mxu0 0.0
    %1686 = vmatpush1.msra.mxu0 0.0
    %1687 = vmatprep.subr.mxu0 0.0
    %1688 = vmatpush1.msra.mxu0 0.0
    %1689 = vmatprep.subr.mxu0 0.0
    %1690 = vmatpush1.msra.mxu0 0.0
    %1691 = vmatprep.subr.mxu0 0.0
    %1692 = vmatpush1.msra.mxu0 0.0
    %1693 = vmatprep.subr.mxu0 0.0
    %1694 = vmatpush1.msra.mxu0 0.0
    %1695 = vmatprep.subr.mxu0 0.0
    %1696 = vmatpush1.msra.mxu0 0.0
    %1697 = vmatprep.subr.mxu0 0.0
    %1698 = vmatpush1.msra.mxu0 0.0
    %1699 = vmatprep.subr.mxu0 0.0
    %1700 = vmatpush1.msra.mxu0 0.0
    %1701 = vmatprep.subr.mxu0 0.0
    %1702 = vmatpush1.msra.mxu0 0.0
    %1703 = vmatprep.subr.mxu0 0.0
    %1704 = vmatpush1.msra.mxu0 0.0
    %1705 = vmatprep.subr.mxu0 0.0
    %1706 = vmatpush1.msra.mxu0 0.0
    %1707 = vmatprep.subr.mxu0 0.0
    %1708 = vmatpush1.msra.mxu0 0.0
    %1709 = vmatprep.subr.mxu0 0.0
    %1710 = vmatpush1.msra.mxu0 0.0
    %1711 = vmatprep.subr.mxu0 0.0
    %1712 = vmatpush1.msra.mxu0 0.0
    %1713 = vmatprep.subr.mxu0 0.0
    %1714 = vmatpush1.msra.mxu0 0.0
    %1715 = vmatprep.subr.mxu0 0.0
    %1716 = vmatpush1.msra.mxu0 0.0
    %1717 = vmatprep.subr.mxu0 0.0
    %1718 = vmatpush1.msra.mxu0 0.0
    %1719 = vmatprep.subr.mxu0 0.0
    %1720 = vmatpush1.msra.mxu0 0.0
    %1721 = vmatprep.subr.mxu0 0.0
    %1722 = vmatpush1.msra.mxu0 0.0
    %1723 = vmatprep.subr.mxu0 0.0
    %1724 = vmatpush1.msra.mxu0 0.0
    %1725 = vmatprep.mubr.f32.mxu0 0.0
    %1726 = vmatmul.mubr.f32.gmra.mrb[0].mxu0 %v1659
    %v1727 = vpop.f32.mrb[0].mxu0
    %v1728 = vadd.f32 0.0, %v1727
    %v1729 = vpop.f32.mrb[0].mxu0
    %1730 = vdwg.mxu0
    %v1731 = vadd.f32 %v1653, %v1728
    %v1732 = vxor.u32 %v1731, 2147483648
    %v1733 = vmul.f32 %v1732, 1.442695
    %v1734 = vpow.pop %v1733
    %v1735 = vadd.f32 %v1734, 1.0
    %v1736 = vrcp.pop %v1735
    %v1737 = vmul.f32 1.0, %v1736
    %v1738 = vtanh.pop %v1731
    %v1739 = vsel %vm46, %v1737, %v1738
    %v1740 = vmul.f32 %v1739, %v1574
    %1742 = vrot.lane.b32.xlu0 %v1739, 32
    %v1743 = vpop.permute.xlu0 %1742
    %v1745 = vmul.f32 %v1739, %v1743
    %1747 = vrot.lane.b32.xlu0 %v1745, 32
    %v1748 = vpop.permute.xlu0 %1747
    %v1750 = vadd.f32 %v1740, %v1748
    %v1751 = vtanh.pop %v1750
    %1753 = vrot.lane.b32.xlu0 %v1751, 32
    %v1754 = vpop.permute.xlu0 %1753
    %v1756 = vmul.f32 %v1739, %v1754
    %v1757 = vld [vmem:[%s6] sm:$0xff]
    %v1758 = vld [vmem:[%s6 + $0x8] sm:$0xff]
    %v1759 = vld [vmem:[%s6 + $0x10] sm:$0xff]
    %v1760 = vld [vmem:[%s6 + $0x18] sm:$0xff]
    %v1761 = vld [vmem:[%s7] sm:$0x1]
    %v1763 = vlaneseq
    %v1764 = vshrl.u32 %v1763, 7
    %v1765 = vsub.s32 0, %v1764
    %v1766 = vrot.slane %v1761, %v1765
    %1769 = vrot.lane.b32.xlu0 %v1756, 64
    %v1770 = vpop.permute.xlu0 %1769
    %v1771 = vsel %vm217, %v1770, 0
    %1773 = vmatprep.subr.mxu0 0.0
    %1774 = vmatpush1.msra.mxu0 %v1757
    %1775 = vmatprep.subr.mxu0 0.0
    %1776 = vmatpush1.msra.mxu0 %v1758
    %1777 = vmatprep.subr.mxu0 0.0
    %1778 = vmatpush1.msra.mxu0 %v1759
    %1779 = vmatprep.subr.mxu0 0.0
    %1780 = vmatpush1.msra.mxu0 %v1760
    %1781 = vmatprep.subr.mxu0 0.0
    %1782 = vmatpush1.msra.mxu0 0.0
    %1783 = vmatprep.subr.mxu0 0.0
    %1784 = vmatpush1.msra.mxu0 0.0
    %1785 = vmatprep.subr.mxu0 0.0
    %1786 = vmatpush1.msra.mxu0 0.0
    %1787 = vmatprep.subr.mxu0 0.0
    %1788 = vmatpush1.msra.mxu0 0.0
    %1789 = vmatprep.subr.mxu0 0.0
    %1790 = vmatpush1.msra.mxu0 0.0
    %1791 = vmatprep.subr.mxu0 0.0
    %1792 = vmatpush1.msra.mxu0 0.0
    %1793 = vmatprep.subr.mxu0 0.0
    %1794 = vmatpush1.msra.mxu0 0.0
    %1795 = vmatprep.subr.mxu0 0.0
    %1796 = vmatpush1.msra.mxu0 0.0
    %1797 = vmatprep.subr.mxu0 0.0
    %1798 = vmatpush1.msra.mxu0 0.0
    %1799 = vmatprep.subr.mxu0 0.0
    %1800 = vmatpush1.msra.mxu0 0.0
    %1801 = vmatprep.subr.mxu0 0.0
    %1802 = vmatpush1.msra.mxu0 0.0
    %1803 = vmatprep.subr.mxu0 0.0
    %1804 = vmatpush1.msra.mxu0 0.0
    %1805 = vmatprep.subr.mxu0 0.0
    %1806 = vmatpush1.msra.mxu0 0.0
    %1807 = vmatprep.subr.mxu0 0.0
    %1808 = vmatpush1.msra.mxu0 0.0
    %1809 = vmatprep.subr.mxu0 0.0
    %1810 = vmatpush1.msra.mxu0 0.0
    %1811 = vmatprep.subr.mxu0 0.0
    %1812 = vmatpush1.msra.mxu0 0.0
    %1813 = vmatprep.subr.mxu0 0.0
    %1814 = vmatpush1.msra.mxu0 0.0
    %1815 = vmatprep.subr.mxu0 0.0
    %1816 = vmatpush1.msra.mxu0 0.0
    %1817 = vmatprep.subr.mxu0 0.0
    %1818 = vmatpush1.msra.mxu0 0.0
    %1819 = vmatprep.subr.mxu0 0.0
    %1820 = vmatpush1.msra.mxu0 0.0
    %1821 = vmatprep.subr.mxu0 0.0
    %1822 = vmatpush1.msra.mxu0 0.0
    %1823 = vmatprep.subr.mxu0 0.0
    %1824 = vmatpush1.msra.mxu0 0.0
    %1825 = vmatprep.subr.mxu0 0.0
    %1826 = vmatpush1.msra.mxu0 0.0
    %1827 = vmatprep.subr.mxu0 0.0
    %1828 = vmatpush1.msra.mxu0 0.0
    %1829 = vmatprep.subr.mxu0 0.0
    %1830 = vmatpush1.msra.mxu0 0.0
    %1831 = vmatprep.subr.mxu0 0.0
    %1832 = vmatpush1.msra.mxu0 0.0
    %1833 = vmatprep.subr.mxu0 0.0
    %1834 = vmatpush1.msra.mxu0 0.0
    %1835 = vmatprep.subr.mxu0 0.0
    %1836 = vmatpush1.msra.mxu0 0.0
    %1837 = vmatprep.mubr.f32.mxu0 0.0
    %1838 = vmatmul.mubr.f32.gmra.mrb[0].mxu0 %v1771
    %v1839 = vpop.f32.mrb[0].mxu0
    %v1840 = vadd.f32 %v1766, %v1839
    %v1841 = vpop.f32.mrb[0].mxu0
    %1842 = vdwg.mxu0
    %1843 = vst.msk [vmem:[#allocation2] sm:$0xff] %vm57, %v1840
    // Predicated region
    $region34: #{tpu_custom_call.1} parent=1 // pred_check
      _
    $region35: #{tpu_custom_call.1} parent=1 // pred_check_branch
      %1845 = sbr.rel (0) target = $region37
    $region36: #{tpu_custom_call.1} parent=1 // pred_region
      %s1847 = ssub.s32 128, 128
      %1848 = vsyncadd [#allocation3], %s1847
      %s1850 = sshll.u32 [#allocation2], 4
      %s1851 = int_to_ptr.vmem [resolvable:$true] %s1850
      %1853 = dma.vmem_to_hbm [thread:$0]  %s1851, 128, %s8, [#allocation3]
    $region37: #{tpu_custom_call.1} parent=1 // pred_fallthru
      _
    // Predicated region
    $region38: #{tpu_custom_call.1} parent=1 // pred_check
      _
    $region39: #{tpu_custom_call.1} parent=1 // pred_check_branch
      %1855 = sbr.rel (0) target = $region41
    $region40: #{tpu_custom_call.1} parent=1 // pred_region
      %1856 = dma.done [#allocation3], 128
    $region41: #{tpu_custom_call.1} parent=1 // pred_fallthru
      _
    %1857 = vsyncpa [#allocation3], 1

</llo_original>
